<compile_context>
chip_gen: v7x
topology: tpu7x:2x2x1
jax: 0.10.0
libtpu: 0.0.40
codegen_flags: <defaults>
</compile_context>

<pallas_src>
import functools

import jax
import jax.numpy as jnp
import numpy as np
from jax.experimental import pallas as pl
from jax.experimental.pallas import tpu as pltpu


def _round8(n):
  return ((n + 7) // 8) * 8


def _round128(n):
  return ((n + 127) // 128) * 128


def _layout(S, A, H, L):
  """Static packing layout shared by pack_params() and the kernel."""
  XW = _round8(S + A)            # K of the fused x-driven matmul ([state|action|pad])
  ZW = _round8(L)                # rows reserved for the fused z-driven weight block
  OUT_USED = 2 * S + 2 * L + 2   # [next | reward | continue | dec | mu | std]
  OUT = _round128(OUT_USED)      # lane-dense output width (single unmasked store)

  # name -> (row_offset, rows_reserved, cols_used); rows are matmul K, cols matmul N.
  order = [
      ("x",  XW,    4 * H),      # fused [enc-L1 | seq-L1 | rew-L1 | cont-L1] on x
      ("e2", H,     H),          # encoder L2
      ("ml", H,     2 * L),      # fused fc_mu | fc_logvar
      ("z",  ZW,    4 * H),      # fused [seq-L1 | rew-L1 | cont-L1 | dec-L1] on z
      ("h2", 3 * H, S + 2),      # fused seq/rew/cont L2 (block diagonal)
      ("d2", H,     H),          # decoder L2
      ("d3", H,     S),          # decoder L3
  ]
  slots, r = {}, 0
  for name, nrows, ncols in order:
    slots[name] = (r, nrows, ncols)
    r += _round8(nrows)
  width = max(128, _round128(max(nc for _, _, nc in order)))

  # bias slab: one bias vector per sublane row. "bx"/"bz" are full 4H wide so the two
  # fused matmul results each get a single unmasked broadcast-add.
  brows = {"bx": (0, 4 * H), "bz": (1, 4 * H), "e2": (2, H), "ml": (3, 2 * L),
           "h2": (4, S + 2), "d2": (5, H), "d3": (6, S)}
  assert max(w for _, w in brows.values()) <= width
  return dict(slots=slots, brows=brows, total_rows=r, width=width,
              XW=XW, ZW=ZW, OUT=OUT, OUT_USED=OUT_USED)


def _make_kernel(S, A, H, L, lay):
  slots = lay["slots"]
  brows = lay["brows"]
  XW, OUT = lay["XW"], lay["OUT"]
  f32 = jnp.float32

  def kernel(state_ref, action_ref, eps_ref, w_ref, b_ref, out_ref):
    B = state_ref.shape[0]

    def w(name, rows=None):
      r0, nr, nc = slots[name]
      rows = nr if rows is None else rows
      return w_ref[r0:r0 + rows, 0:nc]

    def b(name):
      br, width = brows[name]
      return b_ref[br:br + 1, 0:width]

    def mm(act, name, rows=None):
      return jnp.dot(act, w(name, rows), preferred_element_type=f32)

    # ---- in-kernel input packing (no wrapper concat / HBM round trip) ----
    pieces = [state_ref[...], action_ref[...]]
    xpad = XW - (S + A)
    if xpad:
      pieces.append(jnp.zeros((B, xpad), f32))
    x = jnp.concatenate(pieces, axis=1)                  # [B, XW]

    # ---- fused x-driven matmul: enc-L1 + seq/rew/cont-L1 (x part), N = 4H ----
    xo = mm(x, "x") + b("bx")                            # [B, 4H]
    h = jnp.maximum(xo[:, 0:H], 0.0)                     # encoder hidden 1
    head_x = xo[:, H:4 * H]                              # heads-L1 pre-act, x part (+bias)

    # ---- EncoderModel tail ----
    h = jnp.maximum(mm(h, "e2") + b("e2"), 0.0)
    ml = mm(h, "ml") + b("ml")                           # [B, 2L] = mu | logvar
    mu = ml[:, 0:L]
    std = jnp.exp(0.5 * ml[:, L:2 * L])
    z = mu + std * eps_ref[...]                          # posterior rsample

    # ---- fused z-driven matmul: seq/rew/cont-L1 (z part) + dec-L1, N = 4H ----
    zo = mm(z, "z", L) + b("bz")                         # [B, 4H]
    hh = jnp.maximum(head_x + zo[:, 0:3 * H], 0.0)       # fused heads hidden [B, 3H]
    hd = jnp.maximum(zo[:, 3 * H:4 * H], 0.0)            # decoder hidden 1   [B, H]

    # ---- heads L2 (block diagonal) + decoder tail ----
    heads = mm(hh, "h2") + b("h2")                       # [B, S+2] = next | rew | cont
    hd = jnp.maximum(mm(hd, "d2") + b("d2"), 0.0)
    dec = mm(hd, "d3") + b("d3")                         # [B, S]

    # ---- single lane-dense 128-wide output, one unmasked store ----
    pad = OUT - (2 * S + 2 * L + 2)
    out = jnp.concatenate(
        [heads, dec, mu, std, jnp.zeros((B, pad), f32)], axis=1)
    out_ref[...] = out

  return kernel


def init_params(key, state_dim, action_dim, hidden_dim, latent_dim):
  """Deterministic PyTorch-style Linear init, weights stored (in, out)."""

  def linear(k, fan_in, fan_out):
    k1, k2 = jax.random.split(k)
    bound = 1.0 / float(np.sqrt(fan_in))
    w_ = jax.random.uniform(k1, (fan_in, fan_out), jnp.float32, -bound, bound)
    b_ = jax.random.uniform(k2, (1, fan_out), jnp.float32, -bound, bound)
    return w_, b_

  ks = jax.random.split(key, 13)
  S, A, H, L = state_dim, action_dim, hidden_dim, latent_dim
  e_w1, e_b1 = linear(ks[0], S, H)
  e_w2, e_b2 = linear(ks[1], H, H)
  w_mu, b_mu = linear(ks[2], H, L)
  w_lv, b_lv = linear(ks[3], H, L)
  s_w1, s_b1 = linear(ks[4], S + L + A, H)       # input order: [state, z, action]
  s_w2, s_b2 = linear(ks[5], H, S)
  r_w1, r_b1 = linear(ks[6], S + L, H)           # input order: [state, z]
  r_w2, r_b2 = linear(ks[7], H, 1)
  c_w1, c_b1 = linear(ks[8], S + L, H)
  c_w2, c_b2 = linear(ks[9], H, 1)
  d_w1, d_b1 = linear(ks[10], L, H)
  d_w2, d_b2 = linear(ks[11], H, H)
  d_w3, d_b3 = linear(ks[12], H, S)
  return [e_w1, e_b1, e_w2, e_b2, w_mu, b_mu, w_lv, b_lv,
          s_w1, s_b1, s_w2, s_b2,
          r_w1, r_b1, r_w2, r_b2,
          c_w1, c_b1, c_w2, c_b2,
          d_w1, d_b1, d_w2, d_b2, d_w3, d_b3]


def pack_params(params, S, A, H, L):
  """Pack all per-layer parameters into one weight slab + one bias slab (done once)."""
  lay = _layout(S, A, H, L)
  p = [np.asarray(t, np.float32) for t in params]
  (e_w1, e_b1, e_w2, e_b2, w_mu, b_mu, w_lv, b_lv,
   s_w1, s_b1, s_w2, s_b2,
   r_w1, r_b1, r_w2, r_b2,
   c_w1, c_b1, c_w2, c_b2,
   d_w1, d_b1, d_w2, d_b2, d_w3, d_b3) = p

  W = np.zeros((lay["total_rows"], lay["width"]), np.float32)
  Bv = np.zeros((8, lay["width"]), np.float32)
  slots, brows = lay["slots"], lay["brows"]

  def put(name, mat):
    r0, nrows, ncols = slots[name]
    assert mat.shape[0] <= nrows and mat.shape[1] <= ncols
    W[r0:r0 + mat.shape[0], :mat.shape[1]] = mat

  # fused x block: rows = [state | action], cols = [enc-L1 | seq-L1 | rew-L1 | cont-L1].
  xb = np.zeros((S + A, 4 * H), np.float32)
  xb[:S, 0:H] = e_w1                              # encoder: state rows
  xb[:S, H:2 * H] = s_w1[:S]                      # sequence: state rows
  xb[S:S + A, H:2 * H] = s_w1[S + L:S + L + A]    # sequence: action rows
  xb[:S, 2 * H:3 * H] = r_w1[:S]                  # reward:   state rows
  xb[:S, 3 * H:4 * H] = c_w1[:S]                  # continue: state rows
  put("x", xb)

  put("e2", e_w2)
  put("ml", np.concatenate([w_mu, w_lv], axis=1))

  # fused z block: rows = z, cols = [seq-L1 | rew-L1 | cont-L1 | dec-L1].
  zb = np.concatenate([s_w1[S:S + L], r_w1[S:S + L], c_w1[S:S + L], d_w1], axis=1)
  put("z", zb)

  # fused heads L2, block diagonal.
  h2 = np.zeros((3 * H, S + 2), np.float32)
  h2[0:H, 0:S] = s_w2
  h2[H:2 * H, S:S + 1] = r_w2
  h2[2 * H:3 * H, S + 1:S + 2] = c_w2
  put("h2", h2)

  put("d2", d_w2)
  put("d3", d_w3)

  def putb(name, vec):
    br, width = brows[name]
    vec = vec.reshape(-1)
    assert vec.shape[0] == width
    Bv[br, :width] = vec

  putb("bx", np.concatenate([e_b1.reshape(-1), s_b1.reshape(-1),
                             r_b1.reshape(-1), c_b1.reshape(-1)]))
  putb("bz", np.concatenate([np.zeros(3 * H, np.float32), d_b1.reshape(-1)]))
  putb("e2", e_b2)
  putb("ml", np.concatenate([b_mu.reshape(-1), b_lv.reshape(-1)]))
  putb("h2", np.concatenate([s_b2.reshape(-1), r_b2.reshape(-1), c_b2.reshape(-1)]))
  putb("d2", d_b2)
  putb("d3", d_b3)

  return jnp.asarray(W), jnp.asarray(Bv)


@functools.partial(jax.jit, static_argnames=("hidden_dim",))
def simulator_forward(state, action, eps, w_slab, b_slab, *, hidden_dim):
  """Returns (state_next_logits, reward_logits, continue_logits, decoder_logits,
  (prior_mu, prior_std), (post_mu, post_std))."""
  B, S = state.shape
  A = action.shape[1]
  L = eps.shape[1]
  H = hidden_dim
  lay = _layout(S, A, H, L)
  OUT = lay["OUT"]

  vmem = pl.BlockSpec(memory_space=pltpu.MemorySpace.VMEM)
  out = pl.pallas_call(
      _make_kernel(S, A, H, L, lay),
      out_shape=jax.ShapeDtypeStruct((B, OUT), jnp.float32),
      in_specs=[vmem, vmem, vmem, vmem, vmem],
      out_specs=vmem,
  )(state.astype(jnp.float32), action.astype(jnp.float32),
    eps.astype(jnp.float32), w_slab, b_slab)

  next_l = out[:, 0:S]
  rew_l = out[:, S:S + 1]
  cont_l = out[:, S + 1:S + 2]
  dec_l = out[:, S + 2:2 * S + 2]
  mu = out[:, 2 * S + 2:2 * S + 2 + L]
  std = out[:, 2 * S + 2 + L:2 * S + 2 + 2 * L]

  prior = (jnp.zeros_like(mu), jnp.ones_like(std))   # Normal(0, 1) parameters
  posterior = (mu, std)
  return next_l, rew_l, cont_l, dec_l, prior, posterior


def reference_forward(state, action, eps, params):
  """Plain-JAX reference reproducing the PyTorch forward exactly."""
  (e_w1, e_b1, e_w2, e_b2, w_mu, b_mu, w_lv, b_lv,
   s_w1, s_b1, s_w2, s_b2,
   r_w1, r_b1, r_w2, r_b2,
   c_w1, c_b1, c_w2, c_b2,
   d_w1, d_b1, d_w2, d_b2, d_w3, d_b3) = params
  relu = lambda v: jnp.maximum(v, 0.0)
  h = relu(state @ e_w1 + e_b1)
  h = relu(h @ e_w2 + e_b2)
  mu = h @ w_mu + b_mu
  logvar = h @ w_lv + b_lv
  std = jnp.exp(0.5 * logvar)
  z = mu + std * eps
  seq_in = jnp.concatenate([state, z, action], axis=1)
  next_l = relu(seq_in @ s_w1 + s_b1) @ s_w2 + s_b2
  rz = jnp.concatenate([state, z], axis=1)
  rew_l = relu(rz @ r_w1 + r_b1) @ r_w2 + r_b2
  cont_l = relu(rz @ c_w1 + c_b1) @ c_w2 + c_b2
  hd = relu(z @ d_w1 + d_b1)
  hd = relu(hd @ d_w2 + d_b2)
  dec_l = hd @ d_w3 + d_b3
  return next_l, rew_l, cont_l, dec_l, mu, std


if __name__ == "__main__":
  # Small model dims consistent with the module; batch=128 fills one MXU M-tile on v5e.
  # (On v6e/v7x use B>=256 and a leading "parallel" batch grid axis — see header notes.)
  B, state_dim, action_dim, hidden_dim, latent_dim = 128, 16, 4, 32, 8

  key = jax.random.PRNGKey(0)
  k_state, k_action, k_eps, k_params = jax.random.split(key, 4)

  state = jax.random.normal(k_state, (B, state_dim), jnp.float32)
  action = jax.random.normal(k_action, (B, action_dim), jnp.float32)
  eps = jax.random.normal(k_eps, (B, latent_dim), jnp.float32)  # rsample noise

  params = init_params(k_params, state_dim, action_dim, hidden_dim, latent_dim)
  w_slab, b_slab = pack_params(params, state_dim, action_dim, hidden_dim, latent_dim)

  out = simulator_forward(state, action, eps, w_slab, b_slab, hidden_dim=hidden_dim)
  out = jax.block_until_ready(out)
  next_l, rew_l, cont_l, dec_l, prior, posterior = out

  # Correctness check against a plain-JAX reference of the PyTorch forward.
  ref_next, ref_rew, ref_cont, ref_dec, ref_mu, ref_std = reference_forward(
      state, action, eps, params)
  np.testing.assert_allclose(np.asarray(next_l), np.asarray(ref_next), atol=1e-5, rtol=1e-5)
  np.testing.assert_allclose(np.asarray(rew_l), np.asarray(ref_rew), atol=1e-5, rtol=1e-5)
  np.testing.assert_allclose(np.asarray(cont_l), np.asarray(ref_cont), atol=1e-5, rtol=1e-5)
  np.testing.assert_allclose(np.asarray(dec_l), np.asarray(ref_dec), atol=1e-5, rtol=1e-5)
  np.testing.assert_allclose(np.asarray(posterior[0]), np.asarray(ref_mu), atol=1e-5, rtol=1e-5)
  np.testing.assert_allclose(np.asarray(posterior[1]), np.asarray(ref_std), atol=1e-5, rtol=1e-5)
  assert prior[0].shape == ref_mu.shape and prior[1].shape == ref_std.shape

  print("KERNEL_OK")
</pallas_src>

<mosaic_0001>
module attributes {stable_mosaic.version = 11 : i64} {
  func.func @kernel(%arg0: memref<128x16xf32, #tpu.memory_space<vmem>>, %arg1: memref<128x4xf32, #tpu.memory_space<vmem>>, %arg2: memref<128x8xf32, #tpu.memory_space<vmem>>, %arg3: memref<256x128xf32, #tpu.memory_space<vmem>>, %arg4: memref<8x128xf32, #tpu.memory_space<vmem>>, %arg5: memref<128x128xf32, #tpu.memory_space<vmem>>) attributes {dimension_semantics = [], scalar_prefetch = 0 : i64, scratch_operands = 0 : i64, tpu.core_type = #tpu.core_type<tc>} {
    %c0 = arith.constant 0 : index
    %c0_0 = arith.constant 0 : index
    %0 = vector.load %arg0[%c0, %c0_0] : memref<128x16xf32, #tpu.memory_space<vmem>>, vector<128x16xf32>
    %c0_1 = arith.constant 0 : index
    %c0_2 = arith.constant 0 : index
    %1 = vector.load %arg1[%c0_1, %c0_2] : memref<128x4xf32, #tpu.memory_space<vmem>>, vector<128x4xf32>
    %cst = arith.constant 0.000000e+00 : f32
    %2 = vector.broadcast %cst : f32 to vector<128x4xf32>
    %3 = tpu.concatenate %0, %1, %2 in 1 : vector<128x16xf32>, vector<128x4xf32>, vector<128x4xf32> -> vector<128x24xf32>
    %c0_3 = arith.constant 0 : index
    %c0_4 = arith.constant 0 : index
    %4 = vector.load %arg3[%c0_3, %c0_4] : memref<256x128xf32, #tpu.memory_space<vmem>>, vector<24x128xf32>
    %cst_5 = arith.constant dense<0.000000e+00> : vector<128x128xf32>
    %5 = tpu.matmul %3, %4, %cst_5 {dimension_numbers = #tpu.dot_dimension_numbers<[1], [0], [0], [1], [0, 0, 1, 1], [], []>} : vector<128x24xf32>, vector<24x128xf32>, vector<128x128xf32> -> vector<128x128xf32>
    %c0_6 = arith.constant 0 : index
    %c0_7 = arith.constant 0 : index
    %6 = vector.load %arg4[%c0_6, %c0_7] : memref<8x128xf32, #tpu.memory_space<vmem>>, vector<1x128xf32>
    %7 = vector.broadcast %6 : vector<1x128xf32> to vector<128x128xf32>
    %8 = arith.addf %5, %7 : vector<128x128xf32>
    %9 = vector.extract_strided_slice %8 {offsets = [0, 0], sizes = [128, 32], strides = [1, 1]} : vector<128x128xf32> to vector<128x32xf32>
    %cst_8 = arith.constant 0.000000e+00 : f32
    %10 = vector.broadcast %cst_8 : f32 to vector<128x32xf32>
    %11 = arith.maximumf %9, %10 : vector<128x32xf32>
    %12 = vector.extract_strided_slice %8 {offsets = [0, 32], sizes = [128, 96], strides = [1, 1]} : vector<128x128xf32> to vector<128x96xf32>
    %c24 = arith.constant 24 : index
    %c0_9 = arith.constant 0 : index
    %13 = vector.load %arg3[%c24, %c0_9] : memref<256x128xf32, #tpu.memory_space<vmem>>, vector<32x32xf32>
    %cst_10 = arith.constant dense<0.000000e+00> : vector<128x32xf32>
    %14 = tpu.matmul %11, %13, %cst_10 {dimension_numbers = #tpu.dot_dimension_numbers<[1], [0], [0], [1], [0, 0, 1, 1], [], []>} : vector<128x32xf32>, vector<32x32xf32>, vector<128x32xf32> -> vector<128x32xf32>
    %c2 = arith.constant 2 : index
    %c0_11 = arith.constant 0 : index
    %15 = vector.load %arg4[%c2, %c0_11] : memref<8x128xf32, #tpu.memory_space<vmem>>, vector<1x32xf32>
    %16 = vector.broadcast %15 : vector<1x32xf32> to vector<128x32xf32>
    %17 = arith.addf %14, %16 : vector<128x32xf32>
    %cst_12 = arith.constant 0.000000e+00 : f32
    %18 = vector.broadcast %cst_12 : f32 to vector<128x32xf32>
    %19 = arith.maximumf %17, %18 : vector<128x32xf32>
    %c56 = arith.constant 56 : index
    %c0_13 = arith.constant 0 : index
    %20 = vector.load %arg3[%c56, %c0_13] : memref<256x128xf32, #tpu.memory_space<vmem>>, vector<32x16xf32>
    %cst_14 = arith.constant dense<0.000000e+00> : vector<128x16xf32>
    %21 = tpu.matmul %19, %20, %cst_14 {dimension_numbers = #tpu.dot_dimension_numbers<[1], [0], [0], [1], [0, 0, 1, 1], [], []>} : vector<128x32xf32>, vector<32x16xf32>, vector<128x16xf32> -> vector<128x16xf32>
    %c3 = arith.constant 3 : index
    %c0_15 = arith.constant 0 : index
    %22 = vector.load %arg4[%c3, %c0_15] : memref<8x128xf32, #tpu.memory_space<vmem>>, vector<1x16xf32>
    %23 = vector.broadcast %22 : vector<1x16xf32> to vector<128x16xf32>
    %24 = arith.addf %21, %23 : vector<128x16xf32>
    %25 = vector.extract_strided_slice %24 {offsets = [0, 0], sizes = [128, 8], strides = [1, 1]} : vector<128x16xf32> to vector<128x8xf32>
    %26 = vector.extract_strided_slice %24 {offsets = [0, 8], sizes = [128, 8], strides = [1, 1]} : vector<128x16xf32> to vector<128x8xf32>
    %cst_16 = arith.constant 5.000000e-01 : f32
    %27 = vector.broadcast %cst_16 : f32 to vector<128x8xf32>
    %28 = arith.mulf %27, %26 : vector<128x8xf32>
    %29 = math.exp %28 : vector<128x8xf32>
    %c0_17 = arith.constant 0 : index
    %c0_18 = arith.constant 0 : index
    %30 = vector.load %arg2[%c0_17, %c0_18] : memref<128x8xf32, #tpu.memory_space<vmem>>, vector<128x8xf32>
    %31 = arith.mulf %29, %30 : vector<128x8xf32>
    %32 = arith.addf %25, %31 : vector<128x8xf32>
    %c88 = arith.constant 88 : index
    %c0_19 = arith.constant 0 : index
    %33 = vector.load %arg3[%c88, %c0_19] : memref<256x128xf32, #tpu.memory_space<vmem>>, vector<8x128xf32>
    %cst_20 = arith.constant dense<0.000000e+00> : vector<128x128xf32>
    %34 = tpu.matmul %32, %33, %cst_20 {dimension_numbers = #tpu.dot_dimension_numbers<[1], [0], [0], [1], [0, 0, 1, 1], [], []>} : vector<128x8xf32>, vector<8x128xf32>, vector<128x128xf32> -> vector<128x128xf32>
    %c1 = arith.constant 1 : index
    %c0_21 = arith.constant 0 : index
    %35 = vector.load %arg4[%c1, %c0_21] : memref<8x128xf32, #tpu.memory_space<vmem>>, vector<1x128xf32>
    %36 = vector.broadcast %35 : vector<1x128xf32> to vector<128x128xf32>
    %37 = arith.addf %34, %36 : vector<128x128xf32>
    %38 = vector.extract_strided_slice %37 {offsets = [0, 0], sizes = [128, 96], strides = [1, 1]} : vector<128x128xf32> to vector<128x96xf32>
    %39 = arith.addf %12, %38 : vector<128x96xf32>
    %cst_22 = arith.constant 0.000000e+00 : f32
    %40 = vector.broadcast %cst_22 : f32 to vector<128x96xf32>
    %41 = arith.maximumf %39, %40 : vector<128x96xf32>
    %42 = vector.extract_strided_slice %37 {offsets = [0, 96], sizes = [128, 32], strides = [1, 1]} : vector<128x128xf32> to vector<128x32xf32>
    %cst_23 = arith.constant 0.000000e+00 : f32
    %43 = vector.broadcast %cst_23 : f32 to vector<128x32xf32>
    %44 = arith.maximumf %42, %43 : vector<128x32xf32>
    %c96 = arith.constant 96 : index
    %c0_24 = arith.constant 0 : index
    %45 = vector.load %arg3[%c96, %c0_24] : memref<256x128xf32, #tpu.memory_space<vmem>>, vector<96x18xf32>
    %cst_25 = arith.constant dense<0.000000e+00> : vector<128x18xf32>
    %46 = tpu.matmul %41, %45, %cst_25 {dimension_numbers = #tpu.dot_dimension_numbers<[1], [0], [0], [1], [0, 0, 1, 1], [], []>} : vector<128x96xf32>, vector<96x18xf32>, vector<128x18xf32> -> vector<128x18xf32>
    %c4 = arith.constant 4 : index
    %c0_26 = arith.constant 0 : index
    %47 = vector.load %arg4[%c4, %c0_26] : memref<8x128xf32, #tpu.memory_space<vmem>>, vector<1x18xf32>
    %48 = vector.broadcast %47 : vector<1x18xf32> to vector<128x18xf32>
    %49 = arith.addf %46, %48 : vector<128x18xf32>
    %c192 = arith.constant 192 : index
    %c0_27 = arith.constant 0 : index
    %50 = vector.load %arg3[%c192, %c0_27] : memref<256x128xf32, #tpu.memory_space<vmem>>, vector<32x32xf32>
    %cst_28 = arith.constant dense<0.000000e+00> : vector<128x32xf32>
    %51 = tpu.matmul %44, %50, %cst_28 {dimension_numbers = #tpu.dot_dimension_numbers<[1], [0], [0], [1], [0, 0, 1, 1], [], []>} : vector<128x32xf32>, vector<32x32xf32>, vector<128x32xf32> -> vector<128x32xf32>
    %c5 = arith.constant 5 : index
    %c0_29 = arith.constant 0 : index
    %52 = vector.load %arg4[%c5, %c0_29] : memref<8x128xf32, #tpu.memory_space<vmem>>, vector<1x32xf32>
    %53 = vector.broadcast %52 : vector<1x32xf32> to vector<128x32xf32>
    %54 = arith.addf %51, %53 : vector<128x32xf32>
    %cst_30 = arith.constant 0.000000e+00 : f32
    %55 = vector.broadcast %cst_30 : f32 to vector<128x32xf32>
    %56 = arith.maximumf %54, %55 : vector<128x32xf32>
    %c224 = arith.constant 224 : index
    %c0_31 = arith.constant 0 : index
    %57 = vector.load %arg3[%c224, %c0_31] : memref<256x128xf32, #tpu.memory_space<vmem>>, vector<32x16xf32>
    %cst_32 = arith.constant dense<0.000000e+00> : vector<128x16xf32>
    %58 = tpu.matmul %56, %57, %cst_32 {dimension_numbers = #tpu.dot_dimension_numbers<[1], [0], [0], [1], [0, 0, 1, 1], [], []>} : vector<128x32xf32>, vector<32x16xf32>, vector<128x16xf32> -> vector<128x16xf32>
    %c6 = arith.constant 6 : index
    %c0_33 = arith.constant 0 : index
    %59 = vector.load %arg4[%c6, %c0_33] : memref<8x128xf32, #tpu.memory_space<vmem>>, vector<1x16xf32>
    %60 = vector.broadcast %59 : vector<1x16xf32> to vector<128x16xf32>
    %61 = arith.addf %58, %60 : vector<128x16xf32>
    %cst_34 = arith.constant 0.000000e+00 : f32
    %62 = vector.broadcast %cst_34 : f32 to vector<128x78xf32>
    %63 = tpu.concatenate %49, %61, %25, %29, %62 in 1 : vector<128x18xf32>, vector<128x16xf32>, vector<128x8xf32>, vector<128x8xf32>, vector<128x78xf32> -> vector<128x128xf32>
    %c0_35 = arith.constant 0 : index
    %c0_36 = arith.constant 0 : index
    %64 = vector.load %arg5[%c0_35, %c0_36] : memref<128x128xf32, #tpu.memory_space<vmem>>, vector<128x128xf32>
    tpu.vector_store %arg5[%c0_35, %c0_36], %63 {strides = array<i32>} : memref<128x128xf32, #tpu.memory_space<vmem>>, vector<128x128xf32>,
    return
  }
}

</mosaic_0001>

<llo_original>
// kernel: simulator_forward.1
$region0: #{simulator_forward.1}
  #allocation0 [shape = 'u32[]', space=smem, size = 0x4, offset = 0x4, fixed_abs, tag = 'smem constant byte address 0x4 - core index']
  #allocation1 [shape = 'u32[144,128]{1,0:T(1,128)}', space=vmem, size = 0x12000, scoped, tag = 'internal scratch']
  %s0 = inlined_call_operand.vmem [shape: f32[128,16], index: 0, kind: input, shape index: {}]
  %s1 = inlined_call_operand.vmem [shape: f32[128,4], index: 1, kind: input, shape index: {}]
  %s2 = inlined_call_operand.vmem [shape: f32[128,8], index: 2, kind: input, shape index: {}]
  %s3 = inlined_call_operand.vmem [shape: f32[256,128], index: 3, kind: input, shape index: {}]
  %s4 = inlined_call_operand.vmem [shape: f32[8,128], index: 4, kind: input, shape index: {}]
  %s5 = inlined_call_operand.vmem [shape: f32[128,128], index: 5, kind: output, shape index: {}]
  %s6 = sld [smem:[#allocation0]]
  $region30: #{simulator_forward.1} parent=0
    _
  %s8 = ssub.s32 1, %s6
  %s9 = scalar_select 0, %s8, %s6
  // Predicated region
  $region2: #{simulator_forward.1} parent=0 // pred_check
    _
  $region3: #{simulator_forward.1} parent=0 // pred_check_branch
    %11 = sbr.rel (0) target = $region5
  $region4: #{simulator_forward.1} parent=0 // pred_region
    _
  $region5: #{simulator_forward.1} parent=0 // pred_fallthru
    _
  // Predicated region
  $region6: #{simulator_forward.1} parent=0 // pred_check
    _
  $region7: #{simulator_forward.1} parent=0 // pred_check_branch
    %13 = sbr.rel (0) target = $region9
  $region8: #{simulator_forward.1} parent=0 // pred_region
    _
  $region9: #{simulator_forward.1} parent=0 // pred_fallthru
    _
  // Predicated region
  $region10: #{simulator_forward.1} parent=0 // pred_check
    _
  $region11: #{simulator_forward.1} parent=0 // pred_check_branch
    %15 = sbr.rel (0) target = $region13
  $region12: #{simulator_forward.1} parent=0 // pred_region
    _
  $region13: #{simulator_forward.1} parent=0 // pred_fallthru
    _
  // Predicated region
  $region14: #{simulator_forward.1} parent=0 // pred_check
    _
  $region15: #{simulator_forward.1} parent=0 // pred_check_branch
    %17 = sbr.rel (0) target = $region17
  $region16: #{simulator_forward.1} parent=0 // pred_region
    _
  $region17: #{simulator_forward.1} parent=0 // pred_fallthru
    _
  // Predicated region
  $region18: #{simulator_forward.1} parent=0 // pred_check
    _
  $region19: #{simulator_forward.1} parent=0 // pred_check_branch
    %19 = sbr.rel (0) target = $region21
  $region20: #{simulator_forward.1} parent=0 // pred_region
    _
  $region21: #{simulator_forward.1} parent=0 // pred_fallthru
    _
  %v20 = vld [vmem:[%s0] sm:$0xff]
  %v21 = vld [vmem:[%s0 + $0x8] sm:$0xff]
  %v22 = vld [vmem:[%s0 + $0x10] sm:$0xff]
  %v23 = vld [vmem:[%s0 + $0x18] sm:$0xff]
  %v24 = vld [vmem:[%s0 + $0x20] sm:$0xff]
  %v25 = vld [vmem:[%s0 + $0x28] sm:$0xff]
  %v26 = vld [vmem:[%s0 + $0x30] sm:$0xff]
  %v27 = vld [vmem:[%s0 + $0x38] sm:$0xff]
  %v28 = vld [vmem:[%s0 + $0x40] sm:$0xff]
  %v29 = vld [vmem:[%s0 + $0x48] sm:$0xff]
  %v30 = vld [vmem:[%s0 + $0x50] sm:$0xff]
  %v31 = vld [vmem:[%s0 + $0x58] sm:$0xff]
  %v32 = vld [vmem:[%s0 + $0x60] sm:$0xff]
  %v33 = vld [vmem:[%s0 + $0x68] sm:$0xff]
  %v34 = vld [vmem:[%s0 + $0x70] sm:$0xff]
  %v35 = vld [vmem:[%s0 + $0x78] sm:$0xff]
  %v36 = vld [vmem:[%s1] sm:$0xff]
  %v37 = vld [vmem:[%s1 + $0x8] sm:$0xff]
  %v38 = vld [vmem:[%s1 + $0x10] sm:$0xff]
  %v39 = vld [vmem:[%s1 + $0x18] sm:$0xff]
  %v40 = vld [vmem:[%s1 + $0x20] sm:$0xff]
  %v41 = vld [vmem:[%s1 + $0x28] sm:$0xff]
  %v42 = vld [vmem:[%s1 + $0x30] sm:$0xff]
  %v43 = vld [vmem:[%s1 + $0x38] sm:$0xff]
  %v44 = vld [vmem:[%s1 + $0x40] sm:$0xff]
  %v45 = vld [vmem:[%s1 + $0x48] sm:$0xff]
  %v46 = vld [vmem:[%s1 + $0x50] sm:$0xff]
  %v47 = vld [vmem:[%s1 + $0x58] sm:$0xff]
  %v48 = vld [vmem:[%s1 + $0x60] sm:$0xff]
  %v49 = vld [vmem:[%s1 + $0x68] sm:$0xff]
  %v50 = vld [vmem:[%s1 + $0x70] sm:$0xff]
  %v51 = vld [vmem:[%s1 + $0x78] sm:$0xff]
  %68 = vrot.lane.b32.xlu0 %v36, 16
  %v69 = vpop.permute.xlu0 %68
  %70 = vrot.lane.b32.xlu0 %v37, 16
  %v71 = vpop.permute.xlu0 %70
  %72 = vrot.lane.b32.xlu0 %v38, 16
  %v73 = vpop.permute.xlu0 %72
  %74 = vrot.lane.b32.xlu0 %v39, 16
  %v75 = vpop.permute.xlu0 %74
  %76 = vrot.lane.b32.xlu0 %v40, 16
  %v77 = vpop.permute.xlu0 %76
  %78 = vrot.lane.b32.xlu0 %v41, 16
  %v79 = vpop.permute.xlu0 %78
  %80 = vrot.lane.b32.xlu0 %v42, 16
  %v81 = vpop.permute.xlu0 %80
  %82 = vrot.lane.b32.xlu0 %v43, 16
  %v83 = vpop.permute.xlu0 %82
  %84 = vrot.lane.b32.xlu0 %v44, 16
  %v85 = vpop.permute.xlu0 %84
  %86 = vrot.lane.b32.xlu0 %v45, 16
  %v87 = vpop.permute.xlu0 %86
  %88 = vrot.lane.b32.xlu0 %v46, 16
  %v89 = vpop.permute.xlu0 %88
  %90 = vrot.lane.b32.xlu0 %v47, 16
  %v91 = vpop.permute.xlu0 %90
  %92 = vrot.lane.b32.xlu0 %v48, 16
  %v93 = vpop.permute.xlu0 %92
  %94 = vrot.lane.b32.xlu0 %v49, 16
  %v95 = vpop.permute.xlu0 %94
  %96 = vrot.lane.b32.xlu0 %v50, 16
  %v97 = vpop.permute.xlu0 %96
  %98 = vrot.lane.b32.xlu0 %v51, 16
  %v99 = vpop.permute.xlu0 %98
  %vm116 = vcmask 130048
  %v117 = vsel %vm116, %v20, %v69
  %v118 = vsel %vm116, %v21, %v71
  %v119 = vsel %vm116, %v22, %v73
  %v120 = vsel %vm116, %v23, %v75
  %v121 = vsel %vm116, %v24, %v77
  %v122 = vsel %vm116, %v25, %v79
  %v123 = vsel %vm116, %v26, %v81
  %v124 = vsel %vm116, %v27, %v83
  %v125 = vsel %vm116, %v28, %v85
  %v126 = vsel %vm116, %v29, %v87
  %v127 = vsel %vm116, %v30, %v89
  %v128 = vsel %vm116, %v31, %v91
  %v129 = vsel %vm116, %v32, %v93
  %v130 = vsel %vm116, %v33, %v95
  %v131 = vsel %vm116, %v34, %v97
  %v132 = vsel %vm116, %v35, %v99
  %vm133 = vcmask 162816
  %v134 = vsel %vm133, %v117, 0.0
  %v135 = vsel %vm133, %v118, 0.0
  %v136 = vsel %vm133, %v119, 0.0
  %v137 = vsel %vm133, %v120, 0.0
  %v138 = vsel %vm133, %v121, 0.0
  %v139 = vsel %vm133, %v122, 0.0
  %v140 = vsel %vm133, %v123, 0.0
  %v141 = vsel %vm133, %v124, 0.0
  %v142 = vsel %vm133, %v125, 0.0
  %v143 = vsel %vm133, %v126, 0.0
  %v144 = vsel %vm133, %v127, 0.0
  %v145 = vsel %vm133, %v128, 0.0
  %v146 = vsel %vm133, %v129, 0.0
  %v147 = vsel %vm133, %v130, 0.0
  %v148 = vsel %vm133, %v131, 0.0
  %v149 = vsel %vm133, %v132, 0.0
  %v150 = vld [vmem:[%s3] sm:$0xff]
  %v151 = vld [vmem:[%s3 + $0x8] sm:$0xff]
  %v152 = vld [vmem:[%s3 + $0x10] sm:$0xff]
  %v153 = vld [vmem:[%s4] sm:$0x1]
  %v154 = vlaneseq
  %v155 = vshrl.u32 %v154, 7
  %v156 = vsub.s32 0, %v155
  %v157 = vrot.slane %v153, %v156
  %vm158 = vcmask 195584
  %v160 = vsel %vm158, %v134, 0
  %v163 = vsel %vm158, %v135, 0
  %v166 = vsel %vm158, %v136, 0
  %v169 = vsel %vm158, %v137, 0
  %v172 = vsel %vm158, %v138, 0
  %v175 = vsel %vm158, %v139, 0
  %v178 = vsel %vm158, %v140, 0
  %v181 = vsel %vm158, %v141, 0
  %v184 = vsel %vm158, %v142, 0
  %v187 = vsel %vm158, %v143, 0
  %v190 = vsel %vm158, %v144, 0
  %v193 = vsel %vm158, %v145, 0
  %v196 = vsel %vm158, %v146, 0
  %v199 = vsel %vm158, %v147, 0
  %v202 = vsel %vm158, %v148, 0
  %v205 = vsel %vm158, %v149, 0
  %207 = vmatprep.subr.mxu0 0.0
  %208 = vmatpush1.msra.mxu0 %v150
  %209 = vmatprep.subr.mxu0 0.0
  %210 = vmatpush1.msra.mxu0 %v151
  %211 = vmatprep.subr.mxu0 0.0
  %212 = vmatpush1.msra.mxu0 %v152
  %213 = vmatprep.subr.mxu0 0.0
  %214 = vmatpush1.msra.mxu0 0.0
  %215 = vmatprep.subr.mxu0 0.0
  %216 = vmatpush1.msra.mxu0 0.0
  %217 = vmatprep.subr.mxu0 0.0
  %218 = vmatpush1.msra.mxu0 0.0
  %219 = vmatprep.subr.mxu0 0.0
  %220 = vmatpush1.msra.mxu0 0.0
  %221 = vmatprep.subr.mxu0 0.0
  %222 = vmatpush1.msra.mxu0 0.0
  %223 = vmatprep.subr.mxu0 0.0
  %224 = vmatpush1.msra.mxu0 0.0
  %225 = vmatprep.subr.mxu0 0.0
  %226 = vmatpush1.msra.mxu0 0.0
  %227 = vmatprep.subr.mxu0 0.0
  %228 = vmatpush1.msra.mxu0 0.0
  %229 = vmatprep.subr.mxu0 0.0
  %230 = vmatpush1.msra.mxu0 0.0
  %231 = vmatprep.subr.mxu0 0.0
  %232 = vmatpush1.msra.mxu0 0.0
  %233 = vmatprep.subr.mxu0 0.0
  %234 = vmatpush1.msra.mxu0 0.0
  %235 = vmatprep.subr.mxu0 0.0
  %236 = vmatpush1.msra.mxu0 0.0
  %237 = vmatprep.subr.mxu0 0.0
  %238 = vmatpush1.msra.mxu0 0.0
  %239 = vmatprep.subr.mxu0 0.0
  %240 = vmatpush1.msra.mxu0 0.0
  %241 = vmatprep.subr.mxu0 0.0
  %242 = vmatpush1.msra.mxu0 0.0
  %243 = vmatprep.subr.mxu0 0.0
  %244 = vmatpush1.msra.mxu0 0.0
  %245 = vmatprep.subr.mxu0 0.0
  %246 = vmatpush1.msra.mxu0 0.0
  %247 = vmatprep.subr.mxu0 0.0
  %248 = vmatpush1.msra.mxu0 0.0
  %249 = vmatprep.subr.mxu0 0.0
  %250 = vmatpush1.msra.mxu0 0.0
  %251 = vmatprep.subr.mxu0 0.0
  %252 = vmatpush1.msra.mxu0 0.0
  %253 = vmatprep.subr.mxu0 0.0
  %254 = vmatpush1.msra.mxu0 0.0
  %255 = vmatprep.subr.mxu0 0.0
  %256 = vmatpush1.msra.mxu0 0.0
  %257 = vmatprep.subr.mxu0 0.0
  %258 = vmatpush1.msra.mxu0 0.0
  %259 = vmatprep.subr.mxu0 0.0
  %260 = vmatpush1.msra.mxu0 0.0
  %261 = vmatprep.subr.mxu0 0.0
  %262 = vmatpush1.msra.mxu0 0.0
  %263 = vmatprep.subr.mxu0 0.0
  %264 = vmatpush1.msra.mxu0 0.0
  %265 = vmatprep.subr.mxu0 0.0
  %266 = vmatpush1.msra.mxu0 0.0
  %267 = vmatprep.subr.mxu0 0.0
  %268 = vmatpush1.msra.mxu0 0.0
  %269 = vmatprep.subr.mxu0 0.0
  %270 = vmatpush1.msra.mxu0 0.0
  %271 = vmatprep.mubr.f32.mxu0 0.0
  %272 = vmatmul.mubr.f32.gmra.mrb[0].mxu0 %v160
  %v273 = vpop.f32.mrb[0].mxu0
  %v274 = vadd.f32 %v157, %v273
  %v275 = vpop.f32.mrb[0].mxu0
  %276 = vmatprep.mubr.f32.mxu0 0.0
  %277 = vmatmul.mubr.f32.gmra.mrb[0].mxu0 %v163
  %v278 = vpop.f32.mrb[0].mxu0
  %v279 = vadd.f32 %v157, %v278
  %v280 = vpop.f32.mrb[0].mxu0
  %281 = vmatprep.mubr.f32.mxu0 0.0
  %282 = vmatmul.mubr.f32.gmra.mrb[0].mxu0 %v166
  %v283 = vpop.f32.mrb[0].mxu0
  %v284 = vadd.f32 %v157, %v283
  %v285 = vpop.f32.mrb[0].mxu0
  %286 = vmatprep.mubr.f32.mxu0 0.0
  %287 = vmatmul.mubr.f32.gmra.mrb[0].mxu0 %v169
  %v288 = vpop.f32.mrb[0].mxu0
  %v289 = vadd.f32 %v157, %v288
  %v290 = vpop.f32.mrb[0].mxu0
  %291 = vmatprep.mubr.f32.mxu0 0.0
  %292 = vmatmul.mubr.f32.gmra.mrb[0].mxu0 %v172
  %v293 = vpop.f32.mrb[0].mxu0
  %v294 = vadd.f32 %v157, %v293
  %v295 = vpop.f32.mrb[0].mxu0
  %296 = vmatprep.mubr.f32.mxu0 0.0
  %297 = vmatmul.mubr.f32.gmra.mrb[0].mxu0 %v175
  %v298 = vpop.f32.mrb[0].mxu0
  %v299 = vadd.f32 %v157, %v298
  %v300 = vpop.f32.mrb[0].mxu0
  %301 = vmatprep.mubr.f32.mxu0 0.0
  %302 = vmatmul.mubr.f32.gmra.mrb[0].mxu0 %v178
  %v303 = vpop.f32.mrb[0].mxu0
  %v304 = vadd.f32 %v157, %v303
  %v305 = vpop.f32.mrb[0].mxu0
  %306 = vmatprep.mubr.f32.mxu0 0.0
  %307 = vmatmul.mubr.f32.gmra.mrb[0].mxu0 %v181
  %v308 = vpop.f32.mrb[0].mxu0
  %v309 = vadd.f32 %v157, %v308
  %v310 = vpop.f32.mrb[0].mxu0
  %311 = vmatprep.mubr.f32.mxu0 0.0
  %312 = vmatmul.mubr.f32.gmra.mrb[0].mxu0 %v184
  %v313 = vpop.f32.mrb[0].mxu0
  %v314 = vadd.f32 %v157, %v313
  %v315 = vpop.f32.mrb[0].mxu0
  %316 = vmatprep.mubr.f32.mxu0 0.0
  %317 = vmatmul.mubr.f32.gmra.mrb[0].mxu0 %v187
  %v318 = vpop.f32.mrb[0].mxu0
  %v319 = vadd.f32 %v157, %v318
  %v320 = vpop.f32.mrb[0].mxu0
  %321 = vmatprep.mubr.f32.mxu0 0.0
  %322 = vmatmul.mubr.f32.gmra.mrb[0].mxu0 %v190
  %v323 = vpop.f32.mrb[0].mxu0
  %v324 = vadd.f32 %v157, %v323
  %v325 = vpop.f32.mrb[0].mxu0
  %326 = vmatprep.mubr.f32.mxu0 0.0
  %327 = vmatmul.mubr.f32.gmra.mrb[0].mxu0 %v193
  %v328 = vpop.f32.mrb[0].mxu0
  %v329 = vadd.f32 %v157, %v328
  %v330 = vpop.f32.mrb[0].mxu0
  %331 = vmatprep.mubr.f32.mxu0 0.0
  %332 = vmatmul.mubr.f32.gmra.mrb[0].mxu0 %v196
  %v333 = vpop.f32.mrb[0].mxu0
  %v334 = vadd.f32 %v157, %v333
  %v335 = vpop.f32.mrb[0].mxu0
  %336 = vmatprep.mubr.f32.mxu0 0.0
  %337 = vmatmul.mubr.f32.gmra.mrb[0].mxu0 %v199
  %v338 = vpop.f32.mrb[0].mxu0
  %v339 = vadd.f32 %v157, %v338
  %v340 = vpop.f32.mrb[0].mxu0
  %341 = vmatprep.mubr.f32.mxu0 0.0
  %342 = vmatmul.mubr.f32.gmra.mrb[0].mxu0 %v202
  %v343 = vpop.f32.mrb[0].mxu0
  %v344 = vadd.f32 %v157, %v343
  %v345 = vpop.f32.mrb[0].mxu0
  %346 = vmatprep.mubr.f32.mxu0 0.0
  %347 = vmatmul.mubr.f32.gmra.mrb[0].mxu0 %v205
  %v348 = vpop.f32.mrb[0].mxu0
  %v349 = vadd.f32 %v157, %v348
  %v350 = vpop.f32.mrb[0].mxu0
  %351 = vdwg.mxu0
  %v352 = vmax.f32 %v274, 0.0
  %v353 = vmax.f32 %v279, 0.0
  %v354 = vmax.f32 %v284, 0.0
  %v355 = vmax.f32 %v289, 0.0
  %v356 = vmax.f32 %v294, 0.0
  %v357 = vmax.f32 %v299, 0.0
  %v358 = vmax.f32 %v304, 0.0
  %v359 = vmax.f32 %v309, 0.0
  %v360 = vmax.f32 %v314, 0.0
  %v361 = vmax.f32 %v319, 0.0
  %v362 = vmax.f32 %v324, 0.0
  %v363 = vmax.f32 %v329, 0.0
  %v364 = vmax.f32 %v334, 0.0
  %v365 = vmax.f32 %v339, 0.0
  %v366 = vmax.f32 %v344, 0.0
  %v367 = vmax.f32 %v349, 0.0
  %v368 = vld [vmem:[%s3 + $0x18] sm:$0xff]
  %v369 = vld [vmem:[%s3 + $0x20] sm:$0xff]
  %v370 = vld [vmem:[%s3 + $0x28] sm:$0xff]
  %v371 = vld [vmem:[%s3 + $0x30] sm:$0xff]
  %v372 = vld [vmem:[%s4 + $0x2] sm:$0x1]
  %v373 = vlaneseq
  %v374 = vshrl.u32 %v373, 7
  %v375 = vsub.s32 0, %v374
  %v376 = vrot.slane %v372, %v375
  %vm377 = vcmask 261120
  %v379 = vsel %vm377, %v352, 0
  %v382 = vsel %vm377, %v353, 0
  %v385 = vsel %vm377, %v354, 0
  %v388 = vsel %vm377, %v355, 0
  %v391 = vsel %vm377, %v356, 0
  %v394 = vsel %vm377, %v357, 0
  %v397 = vsel %vm377, %v358, 0
  %v400 = vsel %vm377, %v359, 0
  %v403 = vsel %vm377, %v360, 0
  %v406 = vsel %vm377, %v361, 0
  %v409 = vsel %vm377, %v362, 0
  %v412 = vsel %vm377, %v363, 0
  %v415 = vsel %vm377, %v364, 0
  %v418 = vsel %vm377, %v365, 0
  %v421 = vsel %vm377, %v366, 0
  %v424 = vsel %vm377, %v367, 0
  %426 = vmatprep.subr.mxu0 0.0
  %427 = vmatpush1.msra.mxu0 %v368
  %428 = vmatprep.subr.mxu0 0.0
  %429 = vmatpush1.msra.mxu0 %v369
  %430 = vmatprep.subr.mxu0 0.0
  %431 = vmatpush1.msra.mxu0 %v370
  %432 = vmatprep.subr.mxu0 0.0
  %433 = vmatpush1.msra.mxu0 %v371
  %434 = vmatprep.subr.mxu0 0.0
  %435 = vmatpush1.msra.mxu0 0.0
  %436 = vmatprep.subr.mxu0 0.0
  %437 = vmatpush1.msra.mxu0 0.0
  %438 = vmatprep.subr.mxu0 0.0
  %439 = vmatpush1.msra.mxu0 0.0
  %440 = vmatprep.subr.mxu0 0.0
  %441 = vmatpush1.msra.mxu0 0.0
  %442 = vmatprep.subr.mxu0 0.0
  %443 = vmatpush1.msra.mxu0 0.0
  %444 = vmatprep.subr.mxu0 0.0
  %445 = vmatpush1.msra.mxu0 0.0
  %446 = vmatprep.subr.mxu0 0.0
  %447 = vmatpush1.msra.mxu0 0.0
  %448 = vmatprep.subr.mxu0 0.0
  %449 = vmatpush1.msra.mxu0 0.0
  %450 = vmatprep.subr.mxu0 0.0
  %451 = vmatpush1.msra.mxu0 0.0
  %452 = vmatprep.subr.mxu0 0.0
  %453 = vmatpush1.msra.mxu0 0.0
  %454 = vmatprep.subr.mxu0 0.0
  %455 = vmatpush1.msra.mxu0 0.0
  %456 = vmatprep.subr.mxu0 0.0
  %457 = vmatpush1.msra.mxu0 0.0
  %458 = vmatprep.subr.mxu0 0.0
  %459 = vmatpush1.msra.mxu0 0.0
  %460 = vmatprep.subr.mxu0 0.0
  %461 = vmatpush1.msra.mxu0 0.0
  %462 = vmatprep.subr.mxu0 0.0
  %463 = vmatpush1.msra.mxu0 0.0
  %464 = vmatprep.subr.mxu0 0.0
  %465 = vmatpush1.msra.mxu0 0.0
  %466 = vmatprep.subr.mxu0 0.0
  %467 = vmatpush1.msra.mxu0 0.0
  %468 = vmatprep.subr.mxu0 0.0
  %469 = vmatpush1.msra.mxu0 0.0
  %470 = vmatprep.subr.mxu0 0.0
  %471 = vmatpush1.msra.mxu0 0.0
  %472 = vmatprep.subr.mxu0 0.0
  %473 = vmatpush1.msra.mxu0 0.0
  %474 = vmatprep.subr.mxu0 0.0
  %475 = vmatpush1.msra.mxu0 0.0
  %476 = vmatprep.subr.mxu0 0.0
  %477 = vmatpush1.msra.mxu0 0.0
  %478 = vmatprep.subr.mxu0 0.0
  %479 = vmatpush1.msra.mxu0 0.0
  %480 = vmatprep.subr.mxu0 0.0
  %481 = vmatpush1.msra.mxu0 0.0
  %482 = vmatprep.subr.mxu0 0.0
  %483 = vmatpush1.msra.mxu0 0.0
  %484 = vmatprep.subr.mxu0 0.0
  %485 = vmatpush1.msra.mxu0 0.0
  %486 = vmatprep.subr.mxu0 0.0
  %487 = vmatpush1.msra.mxu0 0.0
  %488 = vmatprep.subr.mxu0 0.0
  %489 = vmatpush1.msra.mxu0 0.0
  %490 = vmatprep.mubr.f32.mxu0 0.0
  %491 = vmatmul.mubr.f32.gmra.mrb[0].mxu0 %v379
  %v492 = vpop.f32.mrb[0].mxu0
  %v493 = vadd.f32 %v376, %v492
  %v494 = vpop.f32.mrb[0].mxu0
  %495 = vmatprep.mubr.f32.mxu0 0.0
  %496 = vmatmul.mubr.f32.gmra.mrb[0].mxu0 %v382
  %v497 = vpop.f32.mrb[0].mxu0
  %v498 = vadd.f32 %v376, %v497
  %v499 = vpop.f32.mrb[0].mxu0
  %500 = vmatprep.mubr.f32.mxu0 0.0
  %501 = vmatmul.mubr.f32.gmra.mrb[0].mxu0 %v385
  %v502 = vpop.f32.mrb[0].mxu0
  %v503 = vadd.f32 %v376, %v502
  %v504 = vpop.f32.mrb[0].mxu0
  %505 = vmatprep.mubr.f32.mxu0 0.0
  %506 = vmatmul.mubr.f32.gmra.mrb[0].mxu0 %v388
  %v507 = vpop.f32.mrb[0].mxu0
  %v508 = vadd.f32 %v376, %v507
  %v509 = vpop.f32.mrb[0].mxu0
  %510 = vmatprep.mubr.f32.mxu0 0.0
  %511 = vmatmul.mubr.f32.gmra.mrb[0].mxu0 %v391
  %v512 = vpop.f32.mrb[0].mxu0
  %v513 = vadd.f32 %v376, %v512
  %v514 = vpop.f32.mrb[0].mxu0
  %515 = vmatprep.mubr.f32.mxu0 0.0
  %516 = vmatmul.mubr.f32.gmra.mrb[0].mxu0 %v394
  %v517 = vpop.f32.mrb[0].mxu0
  %v518 = vadd.f32 %v376, %v517
  %v519 = vpop.f32.mrb[0].mxu0
  %520 = vmatprep.mubr.f32.mxu0 0.0
  %521 = vmatmul.mubr.f32.gmra.mrb[0].mxu0 %v397
  %v522 = vpop.f32.mrb[0].mxu0
  %v523 = vadd.f32 %v376, %v522
  %v524 = vpop.f32.mrb[0].mxu0
  %525 = vmatprep.mubr.f32.mxu0 0.0
  %526 = vmatmul.mubr.f32.gmra.mrb[0].mxu0 %v400
  %v527 = vpop.f32.mrb[0].mxu0
  %v528 = vadd.f32 %v376, %v527
  %v529 = vpop.f32.mrb[0].mxu0
  %530 = vmatprep.mubr.f32.mxu0 0.0
  %531 = vmatmul.mubr.f32.gmra.mrb[0].mxu0 %v403
  %v532 = vpop.f32.mrb[0].mxu0
  %v533 = vadd.f32 %v376, %v532
  %v534 = vpop.f32.mrb[0].mxu0
  %535 = vmatprep.mubr.f32.mxu0 0.0
  %536 = vmatmul.mubr.f32.gmra.mrb[0].mxu0 %v406
  %v537 = vpop.f32.mrb[0].mxu0
  %v538 = vadd.f32 %v376, %v537
  %v539 = vpop.f32.mrb[0].mxu0
  %540 = vmatprep.mubr.f32.mxu0 0.0
  %541 = vmatmul.mubr.f32.gmra.mrb[0].mxu0 %v409
  %v542 = vpop.f32.mrb[0].mxu0
  %v543 = vadd.f32 %v376, %v542
  %v544 = vpop.f32.mrb[0].mxu0
  %545 = vmatprep.mubr.f32.mxu0 0.0
  %546 = vmatmul.mubr.f32.gmra.mrb[0].mxu0 %v412
  %v547 = vpop.f32.mrb[0].mxu0
  %v548 = vadd.f32 %v376, %v547
  %v549 = vpop.f32.mrb[0].mxu0
  %550 = vmatprep.mubr.f32.mxu0 0.0
  %551 = vmatmul.mubr.f32.gmra.mrb[0].mxu0 %v415
  %v552 = vpop.f32.mrb[0].mxu0
  %v553 = vadd.f32 %v376, %v552
  %v554 = vpop.f32.mrb[0].mxu0
  %555 = vmatprep.mubr.f32.mxu0 0.0
  %556 = vmatmul.mubr.f32.gmra.mrb[0].mxu0 %v418
  %v557 = vpop.f32.mrb[0].mxu0
  %v558 = vadd.f32 %v376, %v557
  %v559 = vpop.f32.mrb[0].mxu0
  %560 = vmatprep.mubr.f32.mxu0 0.0
  %561 = vmatmul.mubr.f32.gmra.mrb[0].mxu0 %v421
  %v562 = vpop.f32.mrb[0].mxu0
  %v563 = vadd.f32 %v376, %v562
  %v564 = vpop.f32.mrb[0].mxu0
  %565 = vmatprep.mubr.f32.mxu0 0.0
  %566 = vmatmul.mubr.f32.gmra.mrb[0].mxu0 %v424
  %v567 = vpop.f32.mrb[0].mxu0
  %v568 = vadd.f32 %v376, %v567
  %v569 = vpop.f32.mrb[0].mxu0
  %570 = vdwg.mxu0
  %v571 = vmax.f32 %v493, 0.0
  %v572 = vmax.f32 %v498, 0.0
  %v573 = vmax.f32 %v503, 0.0
  %v574 = vmax.f32 %v508, 0.0
  %v575 = vmax.f32 %v513, 0.0
  %v576 = vmax.f32 %v518, 0.0
  %v577 = vmax.f32 %v523, 0.0
  %v578 = vmax.f32 %v528, 0.0
  %v579 = vmax.f32 %v533, 0.0
  %v580 = vmax.f32 %v538, 0.0
  %v581 = vmax.f32 %v543, 0.0
  %v582 = vmax.f32 %v548, 0.0
  %v583 = vmax.f32 %v553, 0.0
  %v584 = vmax.f32 %v558, 0.0
  %v585 = vmax.f32 %v563, 0.0
  %v586 = vmax.f32 %v568, 0.0
  %v587 = vld [vmem:[%s3 + $0x38] sm:$0xff]
  %v588 = vld [vmem:[%s3 + $0x40] sm:$0xff]
  %v589 = vld [vmem:[%s3 + $0x48] sm:$0xff]
  %v590 = vld [vmem:[%s3 + $0x50] sm:$0xff]
  %v591 = vld [vmem:[%s4 + $0x3] sm:$0x1]
  %v592 = vlaneseq
  %v593 = vshrl.u32 %v592, 7
  %v594 = vsub.s32 0, %v593
  %v595 = vrot.slane %v591, %v594
  %v597 = vsel %vm377, %v571, 0
  %v600 = vsel %vm377, %v572, 0
  %v603 = vsel %vm377, %v573, 0
  %v606 = vsel %vm377, %v574, 0
  %v609 = vsel %vm377, %v575, 0
  %v612 = vsel %vm377, %v576, 0
  %v615 = vsel %vm377, %v577, 0
  %v618 = vsel %vm377, %v578, 0
  %v621 = vsel %vm377, %v579, 0
  %v624 = vsel %vm377, %v580, 0
  %v627 = vsel %vm377, %v581, 0
  %v630 = vsel %vm377, %v582, 0
  %v633 = vsel %vm377, %v583, 0
  %v636 = vsel %vm377, %v584, 0
  %v639 = vsel %vm377, %v585, 0
  %v642 = vsel %vm377, %v586, 0
  %644 = vmatprep.subr.mxu0 0.0
  %645 = vmatpush1.msra.mxu0 %v587
  %646 = vmatprep.subr.mxu0 0.0
  %647 = vmatpush1.msra.mxu0 %v588
  %648 = vmatprep.subr.mxu0 0.0
  %649 = vmatpush1.msra.mxu0 %v589
  %650 = vmatprep.subr.mxu0 0.0
  %651 = vmatpush1.msra.mxu0 %v590
  %652 = vmatprep.subr.mxu0 0.0
  %653 = vmatpush1.msra.mxu0 0.0
  %654 = vmatprep.subr.mxu0 0.0
  %655 = vmatpush1.msra.mxu0 0.0
  %656 = vmatprep.subr.mxu0 0.0
  %657 = vmatpush1.msra.mxu0 0.0
  %658 = vmatprep.subr.mxu0 0.0
  %659 = vmatpush1.msra.mxu0 0.0
  %660 = vmatprep.subr.mxu0 0.0
  %661 = vmatpush1.msra.mxu0 0.0
  %662 = vmatprep.subr.mxu0 0.0
  %663 = vmatpush1.msra.mxu0 0.0
  %664 = vmatprep.subr.mxu0 0.0
  %665 = vmatpush1.msra.mxu0 0.0
  %666 = vmatprep.subr.mxu0 0.0
  %667 = vmatpush1.msra.mxu0 0.0
  %668 = vmatprep.subr.mxu0 0.0
  %669 = vmatpush1.msra.mxu0 0.0
  %670 = vmatprep.subr.mxu0 0.0
  %671 = vmatpush1.msra.mxu0 0.0
  %672 = vmatprep.subr.mxu0 0.0
  %673 = vmatpush1.msra.mxu0 0.0
  %674 = vmatprep.subr.mxu0 0.0
  %675 = vmatpush1.msra.mxu0 0.0
  %676 = vmatprep.subr.mxu0 0.0
  %677 = vmatpush1.msra.mxu0 0.0
  %678 = vmatprep.subr.mxu0 0.0
  %679 = vmatpush1.msra.mxu0 0.0
  %680 = vmatprep.subr.mxu0 0.0
  %681 = vmatpush1.msra.mxu0 0.0
  %682 = vmatprep.subr.mxu0 0.0
  %683 = vmatpush1.msra.mxu0 0.0
  %684 = vmatprep.subr.mxu0 0.0
  %685 = vmatpush1.msra.mxu0 0.0
  %686 = vmatprep.subr.mxu0 0.0
  %687 = vmatpush1.msra.mxu0 0.0
  %688 = vmatprep.subr.mxu0 0.0
  %689 = vmatpush1.msra.mxu0 0.0
  %690 = vmatprep.subr.mxu0 0.0
  %691 = vmatpush1.msra.mxu0 0.0
  %692 = vmatprep.subr.mxu0 0.0
  %693 = vmatpush1.msra.mxu0 0.0
  %694 = vmatprep.subr.mxu0 0.0
  %695 = vmatpush1.msra.mxu0 0.0
  %696 = vmatprep.subr.mxu0 0.0
  %697 = vmatpush1.msra.mxu0 0.0
  %698 = vmatprep.subr.mxu0 0.0
  %699 = vmatpush1.msra.mxu0 0.0
  %700 = vmatprep.subr.mxu0 0.0
  %701 = vmatpush1.msra.mxu0 0.0
  %702 = vmatprep.subr.mxu0 0.0
  %703 = vmatpush1.msra.mxu0 0.0
  %704 = vmatprep.subr.mxu0 0.0
  %705 = vmatpush1.msra.mxu0 0.0
  %706 = vmatprep.subr.mxu0 0.0
  %707 = vmatpush1.msra.mxu0 0.0
  %708 = vmatprep.mubr.f32.mxu0 0.0
  %709 = vmatmul.mubr.f32.gmra.mrb[0].mxu0 %v597
  %v710 = vpop.f32.mrb[0].mxu0
  %v711 = vadd.f32 %v595, %v710
  %v712 = vpop.f32.mrb[0].mxu0
  %713 = vmatprep.mubr.f32.mxu0 0.0
  %714 = vmatmul.mubr.f32.gmra.mrb[0].mxu0 %v600
  %v715 = vpop.f32.mrb[0].mxu0
  %v716 = vadd.f32 %v595, %v715
  %v717 = vpop.f32.mrb[0].mxu0
  %718 = vmatprep.mubr.f32.mxu0 0.0
  %719 = vmatmul.mubr.f32.gmra.mrb[0].mxu0 %v603
  %v720 = vpop.f32.mrb[0].mxu0
  %v721 = vadd.f32 %v595, %v720
  %v722 = vpop.f32.mrb[0].mxu0
  %723 = vmatprep.mubr.f32.mxu0 0.0
  %724 = vmatmul.mubr.f32.gmra.mrb[0].mxu0 %v606
  %v725 = vpop.f32.mrb[0].mxu0
  %v726 = vadd.f32 %v595, %v725
  %v727 = vpop.f32.mrb[0].mxu0
  %728 = vmatprep.mubr.f32.mxu0 0.0
  %729 = vmatmul.mubr.f32.gmra.mrb[0].mxu0 %v609
  %v730 = vpop.f32.mrb[0].mxu0
  %v731 = vadd.f32 %v595, %v730
  %v732 = vpop.f32.mrb[0].mxu0
  %733 = vmatprep.mubr.f32.mxu0 0.0
  %734 = vmatmul.mubr.f32.gmra.mrb[0].mxu0 %v612
  %v735 = vpop.f32.mrb[0].mxu0
  %v736 = vadd.f32 %v595, %v735
  %v737 = vpop.f32.mrb[0].mxu0
  %738 = vmatprep.mubr.f32.mxu0 0.0
  %739 = vmatmul.mubr.f32.gmra.mrb[0].mxu0 %v615
  %v740 = vpop.f32.mrb[0].mxu0
  %v741 = vadd.f32 %v595, %v740
  %v742 = vpop.f32.mrb[0].mxu0
  %743 = vmatprep.mubr.f32.mxu0 0.0
  %744 = vmatmul.mubr.f32.gmra.mrb[0].mxu0 %v618
  %v745 = vpop.f32.mrb[0].mxu0
  %v746 = vadd.f32 %v595, %v745
  %v747 = vpop.f32.mrb[0].mxu0
  %748 = vmatprep.mubr.f32.mxu0 0.0
  %749 = vmatmul.mubr.f32.gmra.mrb[0].mxu0 %v621
  %v750 = vpop.f32.mrb[0].mxu0
  %v751 = vadd.f32 %v595, %v750
  %v752 = vpop.f32.mrb[0].mxu0
  %753 = vmatprep.mubr.f32.mxu0 0.0
  %754 = vmatmul.mubr.f32.gmra.mrb[0].mxu0 %v624
  %v755 = vpop.f32.mrb[0].mxu0
  %v756 = vadd.f32 %v595, %v755
  %v757 = vpop.f32.mrb[0].mxu0
  %758 = vmatprep.mubr.f32.mxu0 0.0
  %759 = vmatmul.mubr.f32.gmra.mrb[0].mxu0 %v627
  %v760 = vpop.f32.mrb[0].mxu0
  %v761 = vadd.f32 %v595, %v760
  %v762 = vpop.f32.mrb[0].mxu0
  %763 = vmatprep.mubr.f32.mxu0 0.0
  %764 = vmatmul.mubr.f32.gmra.mrb[0].mxu0 %v630
  %v765 = vpop.f32.mrb[0].mxu0
  %v766 = vadd.f32 %v595, %v765
  %v767 = vpop.f32.mrb[0].mxu0
  %768 = vmatprep.mubr.f32.mxu0 0.0
  %769 = vmatmul.mubr.f32.gmra.mrb[0].mxu0 %v633
  %v770 = vpop.f32.mrb[0].mxu0
  %v771 = vadd.f32 %v595, %v770
  %v772 = vpop.f32.mrb[0].mxu0
  %773 = vmatprep.mubr.f32.mxu0 0.0
  %774 = vmatmul.mubr.f32.gmra.mrb[0].mxu0 %v636
  %v775 = vpop.f32.mrb[0].mxu0
  %v776 = vadd.f32 %v595, %v775
  %v777 = vpop.f32.mrb[0].mxu0
  %778 = vmatprep.mubr.f32.mxu0 0.0
  %779 = vmatmul.mubr.f32.gmra.mrb[0].mxu0 %v639
  %v780 = vpop.f32.mrb[0].mxu0
  %v781 = vadd.f32 %v595, %v780
  %v782 = vpop.f32.mrb[0].mxu0
  %783 = vmatprep.mubr.f32.mxu0 0.0
  %784 = vmatmul.mubr.f32.gmra.mrb[0].mxu0 %v642
  %v785 = vpop.f32.mrb[0].mxu0
  %v786 = vadd.f32 %v595, %v785
  %v787 = vpop.f32.mrb[0].mxu0
  %788 = vdwg.mxu0
  %v789 = vmul.f32 %v711, 0.5
  %v790 = vmul.f32 %v716, 0.5
  %v791 = vmul.f32 %v721, 0.5
  %v792 = vmul.f32 %v726, 0.5
  %v793 = vmul.f32 %v731, 0.5
  %v794 = vmul.f32 %v736, 0.5
  %v795 = vmul.f32 %v741, 0.5
  %v796 = vmul.f32 %v746, 0.5
  %v797 = vmul.f32 %v751, 0.5
  %v798 = vmul.f32 %v756, 0.5
  %v799 = vmul.f32 %v761, 0.5
  %v800 = vmul.f32 %v766, 0.5
  %v801 = vmul.f32 %v771, 0.5
  %v802 = vmul.f32 %v776, 0.5
  %v803 = vmul.f32 %v781, 0.5
  %v804 = vmul.f32 %v786, 0.5
  %v805 = vmul.f32 %v789, 1.442695
  %v806 = vpow.pop %v805
  %v807 = vmul.f32 %v790, 1.442695
  %v808 = vpow.pop %v807
  %v809 = vmul.f32 %v791, 1.442695
  %v810 = vpow.pop %v809
  %v811 = vmul.f32 %v792, 1.442695
  %v812 = vpow.pop %v811
  %v813 = vmul.f32 %v793, 1.442695
  %v814 = vpow.pop %v813
  %v815 = vmul.f32 %v794, 1.442695
  %v816 = vpow.pop %v815
  %v817 = vmul.f32 %v795, 1.442695
  %v818 = vpow.pop %v817
  %v819 = vmul.f32 %v796, 1.442695
  %v820 = vpow.pop %v819
  %v821 = vmul.f32 %v797, 1.442695
  %v822 = vpow.pop %v821
  %v823 = vmul.f32 %v798, 1.442695
  %v824 = vpow.pop %v823
  %v825 = vmul.f32 %v799, 1.442695
  %v826 = vpow.pop %v825
  %v827 = vmul.f32 %v800, 1.442695
  %v828 = vpow.pop %v827
  %v829 = vmul.f32 %v801, 1.442695
  %v830 = vpow.pop %v829
  %v831 = vmul.f32 %v802, 1.442695
  %v832 = vpow.pop %v831
  %v833 = vmul.f32 %v803, 1.442695
  %v834 = vpow.pop %v833
  %v835 = vmul.f32 %v804, 1.442695
  %v836 = vpow.pop %v835
  %v837 = vld [vmem:[%s2] sm:$0xff]
  %v838 = vld [vmem:[%s2 + $0x8] sm:$0xff]
  %v839 = vld [vmem:[%s2 + $0x10] sm:$0xff]
  %v840 = vld [vmem:[%s2 + $0x18] sm:$0xff]
  %v841 = vld [vmem:[%s2 + $0x20] sm:$0xff]
  %v842 = vld [vmem:[%s2 + $0x28] sm:$0xff]
  %v843 = vld [vmem:[%s2 + $0x30] sm:$0xff]
  %v844 = vld [vmem:[%s2 + $0x38] sm:$0xff]
  %v845 = vld [vmem:[%s2 + $0x40] sm:$0xff]
  %v846 = vld [vmem:[%s2 + $0x48] sm:$0xff]
  %v847 = vld [vmem:[%s2 + $0x50] sm:$0xff]
  %v848 = vld [vmem:[%s2 + $0x58] sm:$0xff]
  %v849 = vld [vmem:[%s2 + $0x60] sm:$0xff]
  %v850 = vld [vmem:[%s2 + $0x68] sm:$0xff]
  %v851 = vld [vmem:[%s2 + $0x70] sm:$0xff]
  %v852 = vld [vmem:[%s2 + $0x78] sm:$0xff]
  %869 = vrot.lane.b32.xlu0 %v837, 8
  %v870 = vpop.permute.xlu0 %869
  %871 = vrot.lane.b32.xlu0 %v838, 8
  %v872 = vpop.permute.xlu0 %871
  %873 = vrot.lane.b32.xlu0 %v839, 8
  %v874 = vpop.permute.xlu0 %873
  %875 = vrot.lane.b32.xlu0 %v840, 8
  %v876 = vpop.permute.xlu0 %875
  %877 = vrot.lane.b32.xlu0 %v841, 8
  %v878 = vpop.permute.xlu0 %877
  %879 = vrot.lane.b32.xlu0 %v842, 8
  %v880 = vpop.permute.xlu0 %879
  %881 = vrot.lane.b32.xlu0 %v843, 8
  %v882 = vpop.permute.xlu0 %881
  %883 = vrot.lane.b32.xlu0 %v844, 8
  %v884 = vpop.permute.xlu0 %883
  %885 = vrot.lane.b32.xlu0 %v845, 8
  %v886 = vpop.permute.xlu0 %885
  %887 = vrot.lane.b32.xlu0 %v846, 8
  %v888 = vpop.permute.xlu0 %887
  %889 = vrot.lane.b32.xlu0 %v847, 8
  %v890 = vpop.permute.xlu0 %889
  %891 = vrot.lane.b32.xlu0 %v848, 8
  %v892 = vpop.permute.xlu0 %891
  %893 = vrot.lane.b32.xlu0 %v849, 8
  %v894 = vpop.permute.xlu0 %893
  %895 = vrot.lane.b32.xlu0 %v850, 8
  %v896 = vpop.permute.xlu0 %895
  %897 = vrot.lane.b32.xlu0 %v851, 8
  %v898 = vpop.permute.xlu0 %897
  %899 = vrot.lane.b32.xlu0 %v852, 8
  %v900 = vpop.permute.xlu0 %899
  %v917 = vmul.f32 %v806, %v870
  %v918 = vmul.f32 %v808, %v872
  %v919 = vmul.f32 %v810, %v874
  %v920 = vmul.f32 %v812, %v876
  %v921 = vmul.f32 %v814, %v878
  %v922 = vmul.f32 %v816, %v880
  %v923 = vmul.f32 %v818, %v882
  %v924 = vmul.f32 %v820, %v884
  %v925 = vmul.f32 %v822, %v886
  %v926 = vmul.f32 %v824, %v888
  %v927 = vmul.f32 %v826, %v890
  %v928 = vmul.f32 %v828, %v892
  %v929 = vmul.f32 %v830, %v894
  %v930 = vmul.f32 %v832, %v896
  %v931 = vmul.f32 %v834, %v898
  %v932 = vmul.f32 %v836, %v900
  %949 = vrot.lane.b32.xlu0 %v917, 120
  %v950 = vpop.permute.xlu0 %949
  %951 = vrot.lane.b32.xlu0 %v918, 120
  %v952 = vpop.permute.xlu0 %951
  %953 = vrot.lane.b32.xlu0 %v919, 120
  %v954 = vpop.permute.xlu0 %953
  %955 = vrot.lane.b32.xlu0 %v920, 120
  %v956 = vpop.permute.xlu0 %955
  %957 = vrot.lane.b32.xlu0 %v921, 120
  %v958 = vpop.permute.xlu0 %957
  %959 = vrot.lane.b32.xlu0 %v922, 120
  %v960 = vpop.permute.xlu0 %959
  %961 = vrot.lane.b32.xlu0 %v923, 120
  %v962 = vpop.permute.xlu0 %961
  %963 = vrot.lane.b32.xlu0 %v924, 120
  %v964 = vpop.permute.xlu0 %963
  %965 = vrot.lane.b32.xlu0 %v925, 120
  %v966 = vpop.permute.xlu0 %965
  %967 = vrot.lane.b32.xlu0 %v926, 120
  %v968 = vpop.permute.xlu0 %967
  %969 = vrot.lane.b32.xlu0 %v927, 120
  %v970 = vpop.permute.xlu0 %969
  %971 = vrot.lane.b32.xlu0 %v928, 120
  %v972 = vpop.permute.xlu0 %971
  %973 = vrot.lane.b32.xlu0 %v929, 120
  %v974 = vpop.permute.xlu0 %973
  %975 = vrot.lane.b32.xlu0 %v930, 120
  %v976 = vpop.permute.xlu0 %975
  %977 = vrot.lane.b32.xlu0 %v931, 120
  %v978 = vpop.permute.xlu0 %977
  %979 = vrot.lane.b32.xlu0 %v932, 120
  %v980 = vpop.permute.xlu0 %979
  %v997 = vadd.f32 %v711, %v950
  %v998 = vadd.f32 %v716, %v952
  %v999 = vadd.f32 %v721, %v954
  %v1000 = vadd.f32 %v726, %v956
  %v1001 = vadd.f32 %v731, %v958
  %v1002 = vadd.f32 %v736, %v960
  %v1003 = vadd.f32 %v741, %v962
  %v1004 = vadd.f32 %v746, %v964
  %v1005 = vadd.f32 %v751, %v966
  %v1006 = vadd.f32 %v756, %v968
  %v1007 = vadd.f32 %v761, %v970
  %v1008 = vadd.f32 %v766, %v972
  %v1009 = vadd.f32 %v771, %v974
  %v1010 = vadd.f32 %v776, %v976
  %v1011 = vadd.f32 %v781, %v978
  %v1012 = vadd.f32 %v786, %v980
  %v1013 = vld [vmem:[%s3 + $0x58] sm:$0xff]
  %v1014 = vld [vmem:[%s4 + $0x1] sm:$0x1]
  %v1015 = vlaneseq
  %v1016 = vshrl.u32 %v1015, 7
  %v1017 = vsub.s32 0, %v1016
  %v1018 = vrot.slane %v1014, %v1017
  %vm1019 = vcmask 64512
  %v1021 = vsel %vm1019, %v997, 0
  %v1024 = vsel %vm1019, %v998, 0
  %v1027 = vsel %vm1019, %v999, 0
  %v1030 = vsel %vm1019, %v1000, 0
  %v1033 = vsel %vm1019, %v1001, 0
  %v1036 = vsel %vm1019, %v1002, 0
  %v1039 = vsel %vm1019, %v1003, 0
  %v1042 = vsel %vm1019, %v1004, 0
  %v1045 = vsel %vm1019, %v1005, 0
  %v1048 = vsel %vm1019, %v1006, 0
  %v1051 = vsel %vm1019, %v1007, 0
  %v1054 = vsel %vm1019, %v1008, 0
  %v1057 = vsel %vm1019, %v1009, 0
  %v1060 = vsel %vm1019, %v1010, 0
  %v1063 = vsel %vm1019, %v1011, 0
  %v1066 = vsel %vm1019, %v1012, 0
  %1068 = vmatprep.subr.mxu0 0.0
  %1069 = vmatpush1.msra.mxu0 %v1013
  %1070 = vmatprep.subr.mxu0 0.0
  %1071 = vmatpush1.msra.mxu0 0.0
  %1072 = vmatprep.subr.mxu0 0.0
  %1073 = vmatpush1.msra.mxu0 0.0
  %1074 = vmatprep.subr.mxu0 0.0
  %1075 = vmatpush1.msra.mxu0 0.0
  %1076 = vmatprep.subr.mxu0 0.0
  %1077 = vmatpush1.msra.mxu0 0.0
  %1078 = vmatprep.subr.mxu0 0.0
  %1079 = vmatpush1.msra.mxu0 0.0
  %1080 = vmatprep.subr.mxu0 0.0
  %1081 = vmatpush1.msra.mxu0 0.0
  %1082 = vmatprep.subr.mxu0 0.0
  %1083 = vmatpush1.msra.mxu0 0.0
  %1084 = vmatprep.subr.mxu0 0.0
  %1085 = vmatpush1.msra.mxu0 0.0
  %1086 = vmatprep.subr.mxu0 0.0
  %1087 = vmatpush1.msra.mxu0 0.0
  %1088 = vmatprep.subr.mxu0 0.0
  %1089 = vmatpush1.msra.mxu0 0.0
  %1090 = vmatprep.subr.mxu0 0.0
  %1091 = vmatpush1.msra.mxu0 0.0
  %1092 = vmatprep.subr.mxu0 0.0
  %1093 = vmatpush1.msra.mxu0 0.0
  %1094 = vmatprep.subr.mxu0 0.0
  %1095 = vmatpush1.msra.mxu0 0.0
  %1096 = vmatprep.subr.mxu0 0.0
  %1097 = vmatpush1.msra.mxu0 0.0
  %1098 = vmatprep.subr.mxu0 0.0
  %1099 = vmatpush1.msra.mxu0 0.0
  %1100 = vmatprep.subr.mxu0 0.0
  %1101 = vmatpush1.msra.mxu0 0.0
  %1102 = vmatprep.subr.mxu0 0.0
  %1103 = vmatpush1.msra.mxu0 0.0
  %1104 = vmatprep.subr.mxu0 0.0
  %1105 = vmatpush1.msra.mxu0 0.0
  %1106 = vmatprep.subr.mxu0 0.0
  %1107 = vmatpush1.msra.mxu0 0.0
  %1108 = vmatprep.subr.mxu0 0.0
  %1109 = vmatpush1.msra.mxu0 0.0
  %1110 = vmatprep.subr.mxu0 0.0
  %1111 = vmatpush1.msra.mxu0 0.0
  %1112 = vmatprep.subr.mxu0 0.0
  %1113 = vmatpush1.msra.mxu0 0.0
  %1114 = vmatprep.subr.mxu0 0.0
  %1115 = vmatpush1.msra.mxu0 0.0
  %1116 = vmatprep.subr.mxu0 0.0
  %1117 = vmatpush1.msra.mxu0 0.0
  %1118 = vmatprep.subr.mxu0 0.0
  %1119 = vmatpush1.msra.mxu0 0.0
  %1120 = vmatprep.subr.mxu0 0.0
  %1121 = vmatpush1.msra.mxu0 0.0
  %1122 = vmatprep.subr.mxu0 0.0
  %1123 = vmatpush1.msra.mxu0 0.0
  %1124 = vmatprep.subr.mxu0 0.0
  %1125 = vmatpush1.msra.mxu0 0.0
  %1126 = vmatprep.subr.mxu0 0.0
  %1127 = vmatpush1.msra.mxu0 0.0
  %1128 = vmatprep.subr.mxu0 0.0
  %1129 = vmatpush1.msra.mxu0 0.0
  %1130 = vmatprep.subr.mxu0 0.0
  %1131 = vmatpush1.msra.mxu0 0.0
  %1132 = vmatprep.mubr.f32.mxu0 0.0
  %1133 = vmatmul.mubr.f32.gmra.mrb[0].mxu0 %v1021
  %v1134 = vpop.f32.mrb[0].mxu0
  %v1135 = vadd.f32 %v1018, %v1134
  %v1136 = vpop.f32.mrb[0].mxu0
  %1137 = vmatprep.mubr.f32.mxu0 0.0
  %1138 = vmatmul.mubr.f32.gmra.mrb[0].mxu0 %v1024
  %v1139 = vpop.f32.mrb[0].mxu0
  %v1140 = vadd.f32 %v1018, %v1139
  %v1141 = vpop.f32.mrb[0].mxu0
  %1142 = vmatprep.mubr.f32.mxu0 0.0
  %1143 = vmatmul.mubr.f32.gmra.mrb[0].mxu0 %v1027
  %v1144 = vpop.f32.mrb[0].mxu0
  %v1145 = vadd.f32 %v1018, %v1144
  %v1146 = vpop.f32.mrb[0].mxu0
  %1147 = vmatprep.mubr.f32.mxu0 0.0
  %1148 = vmatmul.mubr.f32.gmra.mrb[0].mxu0 %v1030
  %v1149 = vpop.f32.mrb[0].mxu0
  %v1150 = vadd.f32 %v1018, %v1149
  %v1151 = vpop.f32.mrb[0].mxu0
  %1152 = vmatprep.mubr.f32.mxu0 0.0
  %1153 = vmatmul.mubr.f32.gmra.mrb[0].mxu0 %v1033
  %v1154 = vpop.f32.mrb[0].mxu0
  %v1155 = vadd.f32 %v1018, %v1154
  %v1156 = vpop.f32.mrb[0].mxu0
  %1157 = vmatprep.mubr.f32.mxu0 0.0
  %1158 = vmatmul.mubr.f32.gmra.mrb[0].mxu0 %v1036
  %v1159 = vpop.f32.mrb[0].mxu0
  %v1160 = vadd.f32 %v1018, %v1159
  %v1161 = vpop.f32.mrb[0].mxu0
  %1162 = vmatprep.mubr.f32.mxu0 0.0
  %1163 = vmatmul.mubr.f32.gmra.mrb[0].mxu0 %v1039
  %v1164 = vpop.f32.mrb[0].mxu0
  %v1165 = vadd.f32 %v1018, %v1164
  %v1166 = vpop.f32.mrb[0].mxu0
  %1167 = vmatprep.mubr.f32.mxu0 0.0
  %1168 = vmatmul.mubr.f32.gmra.mrb[0].mxu0 %v1042
  %v1169 = vpop.f32.mrb[0].mxu0
  %v1170 = vadd.f32 %v1018, %v1169
  %v1171 = vpop.f32.mrb[0].mxu0
  %1172 = vmatprep.mubr.f32.mxu0 0.0
  %1173 = vmatmul.mubr.f32.gmra.mrb[0].mxu0 %v1045
  %v1174 = vpop.f32.mrb[0].mxu0
  %v1175 = vadd.f32 %v1018, %v1174
  %v1176 = vpop.f32.mrb[0].mxu0
  %1177 = vmatprep.mubr.f32.mxu0 0.0
  %1178 = vmatmul.mubr.f32.gmra.mrb[0].mxu0 %v1048
  %v1179 = vpop.f32.mrb[0].mxu0
  %v1180 = vadd.f32 %v1018, %v1179
  %v1181 = vpop.f32.mrb[0].mxu0
  %1182 = vmatprep.mubr.f32.mxu0 0.0
  %1183 = vmatmul.mubr.f32.gmra.mrb[0].mxu0 %v1051
  %v1184 = vpop.f32.mrb[0].mxu0
  %v1185 = vadd.f32 %v1018, %v1184
  %v1186 = vpop.f32.mrb[0].mxu0
  %1187 = vmatprep.mubr.f32.mxu0 0.0
  %1188 = vmatmul.mubr.f32.gmra.mrb[0].mxu0 %v1054
  %v1189 = vpop.f32.mrb[0].mxu0
  %v1190 = vadd.f32 %v1018, %v1189
  %v1191 = vpop.f32.mrb[0].mxu0
  %1192 = vmatprep.mubr.f32.mxu0 0.0
  %1193 = vmatmul.mubr.f32.gmra.mrb[0].mxu0 %v1057
  %v1194 = vpop.f32.mrb[0].mxu0
  %v1195 = vadd.f32 %v1018, %v1194
  %v1196 = vpop.f32.mrb[0].mxu0
  %1197 = vmatprep.mubr.f32.mxu0 0.0
  %1198 = vmatmul.mubr.f32.gmra.mrb[0].mxu0 %v1060
  %v1199 = vpop.f32.mrb[0].mxu0
  %v1200 = vadd.f32 %v1018, %v1199
  %v1201 = vpop.f32.mrb[0].mxu0
  %1202 = vmatprep.mubr.f32.mxu0 0.0
  %1203 = vmatmul.mubr.f32.gmra.mrb[0].mxu0 %v1063
  %v1204 = vpop.f32.mrb[0].mxu0
  %v1205 = vadd.f32 %v1018, %v1204
  %v1206 = vpop.f32.mrb[0].mxu0
  %1207 = vmatprep.mubr.f32.mxu0 0.0
  %1208 = vmatmul.mubr.f32.gmra.mrb[0].mxu0 %v1066
  %v1209 = vpop.f32.mrb[0].mxu0
  %v1210 = vadd.f32 %v1018, %v1209
  %v1211 = vpop.f32.mrb[0].mxu0
  %1212 = vdwg.mxu0
  %1229 = vrot.lane.b32.xlu0 %v1135, 32
  %v1230 = vpop.permute.xlu0 %1229
  %1231 = vrot.lane.b32.xlu0 %v1140, 32
  %v1232 = vpop.permute.xlu0 %1231
  %1233 = vrot.lane.b32.xlu0 %v1145, 32
  %v1234 = vpop.permute.xlu0 %1233
  %1235 = vrot.lane.b32.xlu0 %v1150, 32
  %v1236 = vpop.permute.xlu0 %1235
  %1237 = vrot.lane.b32.xlu0 %v1155, 32
  %v1238 = vpop.permute.xlu0 %1237
  %1239 = vrot.lane.b32.xlu0 %v1160, 32
  %v1240 = vpop.permute.xlu0 %1239
  %1241 = vrot.lane.b32.xlu0 %v1165, 32
  %v1242 = vpop.permute.xlu0 %1241
  %1243 = vrot.lane.b32.xlu0 %v1170, 32
  %v1244 = vpop.permute.xlu0 %1243
  %1245 = vrot.lane.b32.xlu0 %v1175, 32
  %v1246 = vpop.permute.xlu0 %1245
  %1247 = vrot.lane.b32.xlu0 %v1180, 32
  %v1248 = vpop.permute.xlu0 %1247
  %1249 = vrot.lane.b32.xlu0 %v1185, 32
  %v1250 = vpop.permute.xlu0 %1249
  %1251 = vrot.lane.b32.xlu0 %v1190, 32
  %v1252 = vpop.permute.xlu0 %1251
  %1253 = vrot.lane.b32.xlu0 %v1195, 32
  %v1254 = vpop.permute.xlu0 %1253
  %1255 = vrot.lane.b32.xlu0 %v1200, 32
  %v1256 = vpop.permute.xlu0 %1255
  %1257 = vrot.lane.b32.xlu0 %v1205, 32
  %v1258 = vpop.permute.xlu0 %1257
  %1259 = vrot.lane.b32.xlu0 %v1210, 32
  %v1260 = vpop.permute.xlu0 %1259
  %v1277 = vadd.f32 %v274, %v1230
  %v1278 = vadd.f32 %v279, %v1232
  %v1279 = vadd.f32 %v284, %v1234
  %v1280 = vadd.f32 %v289, %v1236
  %v1281 = vadd.f32 %v294, %v1238
  %v1282 = vadd.f32 %v299, %v1240
  %v1283 = vadd.f32 %v304, %v1242
  %v1284 = vadd.f32 %v309, %v1244
  %v1285 = vadd.f32 %v314, %v1246
  %v1286 = vadd.f32 %v319, %v1248
  %v1287 = vadd.f32 %v324, %v1250
  %v1288 = vadd.f32 %v329, %v1252
  %v1289 = vadd.f32 %v334, %v1254
  %v1290 = vadd.f32 %v339, %v1256
  %v1291 = vadd.f32 %v344, %v1258
  %v1292 = vadd.f32 %v349, %v1260
  %v1293 = vmax.f32 %v1277, 0.0
  %v1294 = vmax.f32 %v1278, 0.0
  %v1295 = vmax.f32 %v1279, 0.0
  %v1296 = vmax.f32 %v1280, 0.0
  %v1297 = vmax.f32 %v1281, 0.0
  %v1298 = vmax.f32 %v1282, 0.0
  %v1299 = vmax.f32 %v1283, 0.0
  %v1300 = vmax.f32 %v1284, 0.0
  %v1301 = vmax.f32 %v1285, 0.0
  %v1302 = vmax.f32 %v1286, 0.0
  %v1303 = vmax.f32 %v1287, 0.0
  %v1304 = vmax.f32 %v1288, 0.0
  %v1305 = vmax.f32 %v1289, 0.0
  %v1306 = vmax.f32 %v1290, 0.0
  %v1307 = vmax.f32 %v1291, 0.0
  %v1308 = vmax.f32 %v1292, 0.0
  %v1309 = vmax.f32 %v1135, 0.0
  %v1310 = vmax.f32 %v1140, 0.0
  %v1311 = vmax.f32 %v1145, 0.0
  %v1312 = vmax.f32 %v1150, 0.0
  %v1313 = vmax.f32 %v1155, 0.0
  %v1314 = vmax.f32 %v1160, 0.0
  %v1315 = vmax.f32 %v1165, 0.0
  %v1316 = vmax.f32 %v1170, 0.0
  %v1317 = vmax.f32 %v1175, 0.0
  %v1318 = vmax.f32 %v1180, 0.0
  %v1319 = vmax.f32 %v1185, 0.0
  %v1320 = vmax.f32 %v1190, 0.0
  %v1321 = vmax.f32 %v1195, 0.0
  %v1322 = vmax.f32 %v1200, 0.0
  %v1323 = vmax.f32 %v1205, 0.0
  %v1324 = vmax.f32 %v1210, 0.0
  %v1325 = vld [vmem:[%s3 + $0x60] sm:$0xff]
  %v1326 = vld [vmem:[%s3 + $0x68] sm:$0xff]
  %v1327 = vld [vmem:[%s3 + $0x70] sm:$0xff]
  %v1328 = vld [vmem:[%s3 + $0x78] sm:$0xff]
  %v1329 = vld [vmem:[%s3 + $0x80] sm:$0xff]
  %v1330 = vld [vmem:[%s3 + $0x88] sm:$0xff]
  %v1331 = vld [vmem:[%s3 + $0x90] sm:$0xff]
  %v1332 = vld [vmem:[%s3 + $0x98] sm:$0xff]
  %v1333 = vld [vmem:[%s3 + $0xa0] sm:$0xff]
  %v1334 = vld [vmem:[%s3 + $0xa8] sm:$0xff]
  %v1335 = vld [vmem:[%s3 + $0xb0] sm:$0xff]
  %v1336 = vld [vmem:[%s3 + $0xb8] sm:$0xff]
  %v1337 = vld [vmem:[%s4 + $0x4] sm:$0x1]
  %v1338 = vlaneseq
  %v1339 = vshrl.u32 %v1338, 7
  %v1340 = vsub.s32 0, %v1339
  %v1341 = vrot.slane %v1337, %v1340
  %1358 = vrot.lane.b32.xlu0 %v1293, 96
  %v1359 = vpop.permute.xlu0 %1358
  %1360 = vrot.lane.b32.xlu0 %v1294, 96
  %v1361 = vpop.permute.xlu0 %1360
  %1362 = vrot.lane.b32.xlu0 %v1295, 96
  %v1363 = vpop.permute.xlu0 %1362
  %1364 = vrot.lane.b32.xlu0 %v1296, 96
  %v1365 = vpop.permute.xlu0 %1364
  %1366 = vrot.lane.b32.xlu0 %v1297, 96
  %v1367 = vpop.permute.xlu0 %1366
  %1368 = vrot.lane.b32.xlu0 %v1298, 96
  %v1369 = vpop.permute.xlu0 %1368
  %1370 = vrot.lane.b32.xlu0 %v1299, 96
  %v1371 = vpop.permute.xlu0 %1370
  %1372 = vrot.lane.b32.xlu0 %v1300, 96
  %v1373 = vpop.permute.xlu0 %1372
  %1374 = vrot.lane.b32.xlu0 %v1301, 96
  %v1375 = vpop.permute.xlu0 %1374
  %1376 = vrot.lane.b32.xlu0 %v1302, 96
  %v1377 = vpop.permute.xlu0 %1376
  %1378 = vrot.lane.b32.xlu0 %v1303, 96
  %v1379 = vpop.permute.xlu0 %1378
  %1380 = vrot.lane.b32.xlu0 %v1304, 96
  %v1381 = vpop.permute.xlu0 %1380
  %1382 = vrot.lane.b32.xlu0 %v1305, 96
  %v1383 = vpop.permute.xlu0 %1382
  %1384 = vrot.lane.b32.xlu0 %v1306, 96
  %v1385 = vpop.permute.xlu0 %1384
  %1386 = vrot.lane.b32.xlu0 %v1307, 96
  %v1387 = vpop.permute.xlu0 %1386
  %1388 = vrot.lane.b32.xlu0 %v1308, 96
  %v1389 = vpop.permute.xlu0 %1388
  %vm1390 = vcmask 785408
  %v1391 = vsel %vm1390, %v1359, 0
  %v1393 = vsel %vm1390, %v1361, 0
  %v1395 = vsel %vm1390, %v1363, 0
  %v1397 = vsel %vm1390, %v1365, 0
  %v1399 = vsel %vm1390, %v1367, 0
  %v1401 = vsel %vm1390, %v1369, 0
  %v1403 = vsel %vm1390, %v1371, 0
  %v1405 = vsel %vm1390, %v1373, 0
  %v1407 = vsel %vm1390, %v1375, 0
  %v1409 = vsel %vm1390, %v1377, 0
  %v1411 = vsel %vm1390, %v1379, 0
  %v1413 = vsel %vm1390, %v1381, 0
  %v1415 = vsel %vm1390, %v1383, 0
  %v1417 = vsel %vm1390, %v1385, 0
  %v1419 = vsel %vm1390, %v1387, 0
  %v1421 = vsel %vm1390, %v1389, 0
  %1423 = vmatprep.subr.mxu0 0.0
  %1424 = vmatpush1.msra.mxu0 %v1325
  %1425 = vmatprep.subr.mxu0 0.0
  %1426 = vmatpush1.msra.mxu0 %v1326
  %1427 = vmatprep.subr.mxu0 0.0
  %1428 = vmatpush1.msra.mxu0 %v1327
  %1429 = vmatprep.subr.mxu0 0.0
  %1430 = vmatpush1.msra.mxu0 %v1328
  %1431 = vmatprep.subr.mxu0 0.0
  %1432 = vmatpush1.msra.mxu0 %v1329
  %1433 = vmatprep.subr.mxu0 0.0
  %1434 = vmatpush1.msra.mxu0 %v1330
  %1435 = vmatprep.subr.mxu0 0.0
  %1436 = vmatpush1.msra.mxu0 %v1331
  %1437 = vmatprep.subr.mxu0 0.0
  %1438 = vmatpush1.msra.mxu0 %v1332
  %1439 = vmatprep.subr.mxu0 0.0
  %1440 = vmatpush1.msra.mxu0 %v1333
  %1441 = vmatprep.subr.mxu0 0.0
  %1442 = vmatpush1.msra.mxu0 %v1334
  %1443 = vmatprep.subr.mxu0 0.0
  %1444 = vmatpush1.msra.mxu0 %v1335
  %1445 = vmatprep.subr.mxu0 0.0
  %1446 = vmatpush1.msra.mxu0 %v1336
  %1447 = vmatprep.subr.mxu0 0.0
  %1448 = vmatpush1.msra.mxu0 0.0
  %1449 = vmatprep.subr.mxu0 0.0
  %1450 = vmatpush1.msra.mxu0 0.0
  %1451 = vmatprep.subr.mxu0 0.0
  %1452 = vmatpush1.msra.mxu0 0.0
  %1453 = vmatprep.subr.mxu0 0.0
  %1454 = vmatpush1.msra.mxu0 0.0
  %1455 = vmatprep.subr.mxu0 0.0
  %1456 = vmatpush1.msra.mxu0 0.0
  %1457 = vmatprep.subr.mxu0 0.0
  %1458 = vmatpush1.msra.mxu0 0.0
  %1459 = vmatprep.subr.mxu0 0.0
  %1460 = vmatpush1.msra.mxu0 0.0
  %1461 = vmatprep.subr.mxu0 0.0
  %1462 = vmatpush1.msra.mxu0 0.0
  %1463 = vmatprep.subr.mxu0 0.0
  %1464 = vmatpush1.msra.mxu0 0.0
  %1465 = vmatprep.subr.mxu0 0.0
  %1466 = vmatpush1.msra.mxu0 0.0
  %1467 = vmatprep.subr.mxu0 0.0
  %1468 = vmatpush1.msra.mxu0 0.0
  %1469 = vmatprep.subr.mxu0 0.0
  %1470 = vmatpush1.msra.mxu0 0.0
  %1471 = vmatprep.subr.mxu0 0.0
  %1472 = vmatpush1.msra.mxu0 0.0
  %1473 = vmatprep.subr.mxu0 0.0
  %1474 = vmatpush1.msra.mxu0 0.0
  %1475 = vmatprep.subr.mxu0 0.0
  %1476 = vmatpush1.msra.mxu0 0.0
  %1477 = vmatprep.subr.mxu0 0.0
  %1478 = vmatpush1.msra.mxu0 0.0
  %1479 = vmatprep.subr.mxu0 0.0
  %1480 = vmatpush1.msra.mxu0 0.0
  %1481 = vmatprep.subr.mxu0 0.0
  %1482 = vmatpush1.msra.mxu0 0.0
  %1483 = vmatprep.subr.mxu0 0.0
  %1484 = vmatpush1.msra.mxu0 0.0
  %1485 = vmatprep.subr.mxu0 0.0
  %1486 = vmatpush1.msra.mxu0 0.0
  %1487 = vmatprep.mubr.f32.mxu0 0.0
  %1488 = vmatmul.mubr.f32.gmra.mrb[0].mxu0 %v1391
  %v1489 = vpop.f32.mrb[0].mxu0
  %v1490 = vadd.f32 %v1341, %v1489
  %v1491 = vpop.f32.mrb[0].mxu0
  %1492 = vmatprep.mubr.f32.mxu0 0.0
  %1493 = vmatmul.mubr.f32.gmra.mrb[0].mxu0 %v1393
  %v1494 = vpop.f32.mrb[0].mxu0
  %v1495 = vadd.f32 %v1341, %v1494
  %v1496 = vpop.f32.mrb[0].mxu0
  %1497 = vmatprep.mubr.f32.mxu0 0.0
  %1498 = vmatmul.mubr.f32.gmra.mrb[0].mxu0 %v1395
  %v1499 = vpop.f32.mrb[0].mxu0
  %v1500 = vadd.f32 %v1341, %v1499
  %v1501 = vpop.f32.mrb[0].mxu0
  %1502 = vmatprep.mubr.f32.mxu0 0.0
  %1503 = vmatmul.mubr.f32.gmra.mrb[0].mxu0 %v1397
  %v1504 = vpop.f32.mrb[0].mxu0
  %v1505 = vadd.f32 %v1341, %v1504
  %v1506 = vpop.f32.mrb[0].mxu0
  %1507 = vmatprep.mubr.f32.mxu0 0.0
  %1508 = vmatmul.mubr.f32.gmra.mrb[0].mxu0 %v1399
  %v1509 = vpop.f32.mrb[0].mxu0
  %v1510 = vadd.f32 %v1341, %v1509
  %v1511 = vpop.f32.mrb[0].mxu0
  %1512 = vmatprep.mubr.f32.mxu0 0.0
  %1513 = vmatmul.mubr.f32.gmra.mrb[0].mxu0 %v1401
  %v1514 = vpop.f32.mrb[0].mxu0
  %v1515 = vadd.f32 %v1341, %v1514
  %v1516 = vpop.f32.mrb[0].mxu0
  %1517 = vmatprep.mubr.f32.mxu0 0.0
  %1518 = vmatmul.mubr.f32.gmra.mrb[0].mxu0 %v1403
  %v1519 = vpop.f32.mrb[0].mxu0
  %v1520 = vadd.f32 %v1341, %v1519
  %v1521 = vpop.f32.mrb[0].mxu0
  %1522 = vmatprep.mubr.f32.mxu0 0.0
  %1523 = vmatmul.mubr.f32.gmra.mrb[0].mxu0 %v1405
  %v1524 = vpop.f32.mrb[0].mxu0
  %v1525 = vadd.f32 %v1341, %v1524
  %v1526 = vpop.f32.mrb[0].mxu0
  %1527 = vmatprep.mubr.f32.mxu0 0.0
  %1528 = vmatmul.mubr.f32.gmra.mrb[0].mxu0 %v1407
  %v1529 = vpop.f32.mrb[0].mxu0
  %v1530 = vadd.f32 %v1341, %v1529
  %v1531 = vpop.f32.mrb[0].mxu0
  %1532 = vmatprep.mubr.f32.mxu0 0.0
  %1533 = vmatmul.mubr.f32.gmra.mrb[0].mxu0 %v1409
  %v1534 = vpop.f32.mrb[0].mxu0
  %v1535 = vadd.f32 %v1341, %v1534
  %v1536 = vpop.f32.mrb[0].mxu0
  %1537 = vmatprep.mubr.f32.mxu0 0.0
  %1538 = vmatmul.mubr.f32.gmra.mrb[0].mxu0 %v1411
  %v1539 = vpop.f32.mrb[0].mxu0
  %v1540 = vadd.f32 %v1341, %v1539
  %v1541 = vpop.f32.mrb[0].mxu0
  %1542 = vmatprep.mubr.f32.mxu0 0.0
  %1543 = vmatmul.mubr.f32.gmra.mrb[0].mxu0 %v1413
  %v1544 = vpop.f32.mrb[0].mxu0
  %v1545 = vadd.f32 %v1341, %v1544
  %v1546 = vpop.f32.mrb[0].mxu0
  %1547 = vmatprep.mubr.f32.mxu0 0.0
  %1548 = vmatmul.mubr.f32.gmra.mrb[0].mxu0 %v1415
  %v1549 = vpop.f32.mrb[0].mxu0
  %v1550 = vadd.f32 %v1341, %v1549
  %v1551 = vpop.f32.mrb[0].mxu0
  %1552 = vmatprep.mubr.f32.mxu0 0.0
  %1553 = vmatmul.mubr.f32.gmra.mrb[0].mxu0 %v1417
  %v1554 = vpop.f32.mrb[0].mxu0
  %v1555 = vadd.f32 %v1341, %v1554
  %v1556 = vpop.f32.mrb[0].mxu0
  %1557 = vmatprep.mubr.f32.mxu0 0.0
  %1558 = vmatmul.mubr.f32.gmra.mrb[0].mxu0 %v1419
  %v1559 = vpop.f32.mrb[0].mxu0
  %v1560 = vadd.f32 %v1341, %v1559
  %v1561 = vpop.f32.mrb[0].mxu0
  %1562 = vmatprep.mubr.f32.mxu0 0.0
  %1563 = vmatmul.mubr.f32.gmra.mrb[0].mxu0 %v1421
  %v1564 = vpop.f32.mrb[0].mxu0
  %v1565 = vadd.f32 %v1341, %v1564
  %v1566 = vpop.f32.mrb[0].mxu0
  %1567 = vdwg.mxu0
  %v1568 = vld [vmem:[%s3 + $0xc0] sm:$0xff]
  %v1569 = vld [vmem:[%s3 + $0xc8] sm:$0xff]
  %v1570 = vld [vmem:[%s3 + $0xd0] sm:$0xff]
  %v1571 = vld [vmem:[%s3 + $0xd8] sm:$0xff]
  %v1572 = vld [vmem:[%s4 + $0x5] sm:$0x1]
  %v1573 = vlaneseq
  %v1574 = vshrl.u32 %v1573, 7
  %v1575 = vsub.s32 0, %v1574
  %v1576 = vrot.slane %v1572, %v1575
  %1593 = vrot.lane.b32.xlu0 %v1309, 32
  %v1594 = vpop.permute.xlu0 %1593
  %1595 = vrot.lane.b32.xlu0 %v1310, 32
  %v1596 = vpop.permute.xlu0 %1595
  %1597 = vrot.lane.b32.xlu0 %v1311, 32
  %v1598 = vpop.permute.xlu0 %1597
  %1599 = vrot.lane.b32.xlu0 %v1312, 32
  %v1600 = vpop.permute.xlu0 %1599
  %1601 = vrot.lane.b32.xlu0 %v1313, 32
  %v1602 = vpop.permute.xlu0 %1601
  %1603 = vrot.lane.b32.xlu0 %v1314, 32
  %v1604 = vpop.permute.xlu0 %1603
  %1605 = vrot.lane.b32.xlu0 %v1315, 32
  %v1606 = vpop.permute.xlu0 %1605
  %1607 = vrot.lane.b32.xlu0 %v1316, 32
  %v1608 = vpop.permute.xlu0 %1607
  %1609 = vrot.lane.b32.xlu0 %v1317, 32
  %v1610 = vpop.permute.xlu0 %1609
  %1611 = vrot.lane.b32.xlu0 %v1318, 32
  %v1612 = vpop.permute.xlu0 %1611
  %1613 = vrot.lane.b32.xlu0 %v1319, 32
  %v1614 = vpop.permute.xlu0 %1613
  %1615 = vrot.lane.b32.xlu0 %v1320, 32
  %v1616 = vpop.permute.xlu0 %1615
  %1617 = vrot.lane.b32.xlu0 %v1321, 32
  %v1618 = vpop.permute.xlu0 %1617
  %1619 = vrot.lane.b32.xlu0 %v1322, 32
  %v1620 = vpop.permute.xlu0 %1619
  %1621 = vrot.lane.b32.xlu0 %v1323, 32
  %v1622 = vpop.permute.xlu0 %1621
  %1623 = vrot.lane.b32.xlu0 %v1324, 32
  %v1624 = vpop.permute.xlu0 %1623
  %v1625 = vsel %vm377, %v1594, 0
  %v1627 = vsel %vm377, %v1596, 0
  %v1629 = vsel %vm377, %v1598, 0
  %v1631 = vsel %vm377, %v1600, 0
  %v1633 = vsel %vm377, %v1602, 0
  %v1635 = vsel %vm377, %v1604, 0
  %v1637 = vsel %vm377, %v1606, 0
  %v1639 = vsel %vm377, %v1608, 0
  %v1641 = vsel %vm377, %v1610, 0
  %v1643 = vsel %vm377, %v1612, 0
  %v1645 = vsel %vm377, %v1614, 0
  %v1647 = vsel %vm377, %v1616, 0
  %v1649 = vsel %vm377, %v1618, 0
  %v1651 = vsel %vm377, %v1620, 0
  %v1653 = vsel %vm377, %v1622, 0
  %v1655 = vsel %vm377, %v1624, 0
  %1657 = vmatprep.subr.mxu0 0.0
  %1658 = vmatpush1.msra.mxu0 %v1568
  %1659 = vmatprep.subr.mxu0 0.0
  %1660 = vmatpush1.msra.mxu0 %v1569
  %1661 = vmatprep.subr.mxu0 0.0
  %1662 = vmatpush1.msra.mxu0 %v1570
  %1663 = vmatprep.subr.mxu0 0.0
  %1664 = vmatpush1.msra.mxu0 %v1571
  %1665 = vmatprep.subr.mxu0 0.0
  %1666 = vmatpush1.msra.mxu0 0.0
  %1667 = vmatprep.subr.mxu0 0.0
  %1668 = vmatpush1.msra.mxu0 0.0
  %1669 = vmatprep.subr.mxu0 0.0
  %1670 = vmatpush1.msra.mxu0 0.0
  %1671 = vmatprep.subr.mxu0 0.0
  %1672 = vmatpush1.msra.mxu0 0.0
  %1673 = vmatprep.subr.mxu0 0.0
  %1674 = vmatpush1.msra.mxu0 0.0
  %1675 = vmatprep.subr.mxu0 0.0
  %1676 = vmatpush1.msra.mxu0 0.0
  %1677 = vmatprep.subr.mxu0 0.0
  %1678 = vmatpush1.msra.mxu0 0.0
  %1679 = vmatprep.subr.mxu0 0.0
  %1680 = vmatpush1.msra.mxu0 0.0
  %1681 = vmatprep.subr.mxu0 0.0
  %1682 = vmatpush1.msra.mxu0 0.0
  %1683 = vmatprep.subr.mxu0 0.0
  %1684 = vmatpush1.msra.mxu0 0.0
  %1685 = vmatprep.subr.mxu0 0.0
  %1686 = vmatpush1.msra.mxu0 0.0
  %1687 = vmatprep.subr.mxu0 0.0
  %1688 = vmatpush1.msra.mxu0 0.0
  %1689 = vmatprep.subr.mxu0 0.0
  %1690 = vmatpush1.msra.mxu0 0.0
  %1691 = vmatprep.subr.mxu0 0.0
  %1692 = vmatpush1.msra.mxu0 0.0
  %1693 = vmatprep.subr.mxu0 0.0
  %1694 = vmatpush1.msra.mxu0 0.0
  %1695 = vmatprep.subr.mxu0 0.0
  %1696 = vmatpush1.msra.mxu0 0.0
  %1697 = vmatprep.subr.mxu0 0.0
  %1698 = vmatpush1.msra.mxu0 0.0
  %1699 = vmatprep.subr.mxu0 0.0
  %1700 = vmatpush1.msra.mxu0 0.0
  %1701 = vmatprep.subr.mxu0 0.0
  %1702 = vmatpush1.msra.mxu0 0.0
  %1703 = vmatprep.subr.mxu0 0.0
  %1704 = vmatpush1.msra.mxu0 0.0
  %1705 = vmatprep.subr.mxu0 0.0
  %1706 = vmatpush1.msra.mxu0 0.0
  %1707 = vmatprep.subr.mxu0 0.0
  %1708 = vmatpush1.msra.mxu0 0.0
  %1709 = vmatprep.subr.mxu0 0.0
  %1710 = vmatpush1.msra.mxu0 0.0
  %1711 = vmatprep.subr.mxu0 0.0
  %1712 = vmatpush1.msra.mxu0 0.0
  %1713 = vmatprep.subr.mxu0 0.0
  %1714 = vmatpush1.msra.mxu0 0.0
  %1715 = vmatprep.subr.mxu0 0.0
  %1716 = vmatpush1.msra.mxu0 0.0
  %1717 = vmatprep.subr.mxu0 0.0
  %1718 = vmatpush1.msra.mxu0 0.0
  %1719 = vmatprep.subr.mxu0 0.0
  %1720 = vmatpush1.msra.mxu0 0.0
  %1721 = vmatprep.mubr.f32.mxu0 0.0
  %1722 = vmatmul.mubr.f32.gmra.mrb[0].mxu0 %v1625
  %v1723 = vpop.f32.mrb[0].mxu0
  %v1724 = vadd.f32 %v1576, %v1723
  %v1725 = vpop.f32.mrb[0].mxu0
  %1726 = vmatprep.mubr.f32.mxu0 0.0
  %1727 = vmatmul.mubr.f32.gmra.mrb[0].mxu0 %v1627
  %v1728 = vpop.f32.mrb[0].mxu0
  %v1729 = vadd.f32 %v1576, %v1728
  %v1730 = vpop.f32.mrb[0].mxu0
  %1731 = vmatprep.mubr.f32.mxu0 0.0
  %1732 = vmatmul.mubr.f32.gmra.mrb[0].mxu0 %v1629
  %v1733 = vpop.f32.mrb[0].mxu0
  %v1734 = vadd.f32 %v1576, %v1733
  %v1735 = vpop.f32.mrb[0].mxu0
  %1736 = vmatprep.mubr.f32.mxu0 0.0
  %1737 = vmatmul.mubr.f32.gmra.mrb[0].mxu0 %v1631
  %v1738 = vpop.f32.mrb[0].mxu0
  %v1739 = vadd.f32 %v1576, %v1738
  %v1740 = vpop.f32.mrb[0].mxu0
  %1741 = vmatprep.mubr.f32.mxu0 0.0
  %1742 = vmatmul.mubr.f32.gmra.mrb[0].mxu0 %v1633
  %v1743 = vpop.f32.mrb[0].mxu0
  %v1744 = vadd.f32 %v1576, %v1743
  %v1745 = vpop.f32.mrb[0].mxu0
  %1746 = vmatprep.mubr.f32.mxu0 0.0
  %1747 = vmatmul.mubr.f32.gmra.mrb[0].mxu0 %v1635
  %v1748 = vpop.f32.mrb[0].mxu0
  %v1749 = vadd.f32 %v1576, %v1748
  %v1750 = vpop.f32.mrb[0].mxu0
  %1751 = vmatprep.mubr.f32.mxu0 0.0
  %1752 = vmatmul.mubr.f32.gmra.mrb[0].mxu0 %v1637
  %v1753 = vpop.f32.mrb[0].mxu0
  %v1754 = vadd.f32 %v1576, %v1753
  %v1755 = vpop.f32.mrb[0].mxu0
  %1756 = vmatprep.mubr.f32.mxu0 0.0
  %1757 = vmatmul.mubr.f32.gmra.mrb[0].mxu0 %v1639
  %v1758 = vpop.f32.mrb[0].mxu0
  %v1759 = vadd.f32 %v1576, %v1758
  %v1760 = vpop.f32.mrb[0].mxu0
  %1761 = vmatprep.mubr.f32.mxu0 0.0
  %1762 = vmatmul.mubr.f32.gmra.mrb[0].mxu0 %v1641
  %v1763 = vpop.f32.mrb[0].mxu0
  %v1764 = vadd.f32 %v1576, %v1763
  %v1765 = vpop.f32.mrb[0].mxu0
  %1766 = vmatprep.mubr.f32.mxu0 0.0
  %1767 = vmatmul.mubr.f32.gmra.mrb[0].mxu0 %v1643
  %v1768 = vpop.f32.mrb[0].mxu0
  %v1769 = vadd.f32 %v1576, %v1768
  %v1770 = vpop.f32.mrb[0].mxu0
  %1771 = vmatprep.mubr.f32.mxu0 0.0
  %1772 = vmatmul.mubr.f32.gmra.mrb[0].mxu0 %v1645
  %v1773 = vpop.f32.mrb[0].mxu0
  %v1774 = vadd.f32 %v1576, %v1773
  %v1775 = vpop.f32.mrb[0].mxu0
  %1776 = vmatprep.mubr.f32.mxu0 0.0
  %1777 = vmatmul.mubr.f32.gmra.mrb[0].mxu0 %v1647
  %v1778 = vpop.f32.mrb[0].mxu0
  %v1779 = vadd.f32 %v1576, %v1778
  %v1780 = vpop.f32.mrb[0].mxu0
  %1781 = vmatprep.mubr.f32.mxu0 0.0
  %1782 = vmatmul.mubr.f32.gmra.mrb[0].mxu0 %v1649
  %v1783 = vpop.f32.mrb[0].mxu0
  %v1784 = vadd.f32 %v1576, %v1783
  %v1785 = vpop.f32.mrb[0].mxu0
  %1786 = vmatprep.mubr.f32.mxu0 0.0
  %1787 = vmatmul.mubr.f32.gmra.mrb[0].mxu0 %v1651
  %v1788 = vpop.f32.mrb[0].mxu0
  %v1789 = vadd.f32 %v1576, %v1788
  %v1790 = vpop.f32.mrb[0].mxu0
  %1791 = vmatprep.mubr.f32.mxu0 0.0
  %1792 = vmatmul.mubr.f32.gmra.mrb[0].mxu0 %v1653
  %v1793 = vpop.f32.mrb[0].mxu0
  %v1794 = vadd.f32 %v1576, %v1793
  %v1795 = vpop.f32.mrb[0].mxu0
  %1796 = vmatprep.mubr.f32.mxu0 0.0
  %1797 = vmatmul.mubr.f32.gmra.mrb[0].mxu0 %v1655
  %v1798 = vpop.f32.mrb[0].mxu0
  %v1799 = vadd.f32 %v1576, %v1798
  %v1800 = vpop.f32.mrb[0].mxu0
  %1801 = vdwg.mxu0
  %v1802 = vmax.f32 %v1724, 0.0
  %v1803 = vmax.f32 %v1729, 0.0
  %v1804 = vmax.f32 %v1734, 0.0
  %v1805 = vmax.f32 %v1739, 0.0
  %v1806 = vmax.f32 %v1744, 0.0
  %v1807 = vmax.f32 %v1749, 0.0
  %v1808 = vmax.f32 %v1754, 0.0
  %v1809 = vmax.f32 %v1759, 0.0
  %v1810 = vmax.f32 %v1764, 0.0
  %v1811 = vmax.f32 %v1769, 0.0
  %v1812 = vmax.f32 %v1774, 0.0
  %v1813 = vmax.f32 %v1779, 0.0
  %v1814 = vmax.f32 %v1784, 0.0
  %v1815 = vmax.f32 %v1789, 0.0
  %v1816 = vmax.f32 %v1794, 0.0
  %v1817 = vmax.f32 %v1799, 0.0
  %v1818 = vld [vmem:[%s3 + $0xe0] sm:$0xff]
  %v1819 = vld [vmem:[%s3 + $0xe8] sm:$0xff]
  %v1820 = vld [vmem:[%s3 + $0xf0] sm:$0xff]
  %v1821 = vld [vmem:[%s3 + $0xf8] sm:$0xff]
  %v1822 = vld [vmem:[%s4 + $0x6] sm:$0x1]
  %v1823 = vlaneseq
  %v1824 = vshrl.u32 %v1823, 7
  %v1825 = vsub.s32 0, %v1824
  %v1826 = vrot.slane %v1822, %v1825
  %v1828 = vsel %vm377, %v1802, 0
  %v1831 = vsel %vm377, %v1803, 0
  %v1834 = vsel %vm377, %v1804, 0
  %v1837 = vsel %vm377, %v1805, 0
  %v1840 = vsel %vm377, %v1806, 0
  %v1843 = vsel %vm377, %v1807, 0
  %v1846 = vsel %vm377, %v1808, 0
  %v1849 = vsel %vm377, %v1809, 0
  %v1852 = vsel %vm377, %v1810, 0
  %v1855 = vsel %vm377, %v1811, 0
  %v1858 = vsel %vm377, %v1812, 0
  %v1861 = vsel %vm377, %v1813, 0
  %v1864 = vsel %vm377, %v1814, 0
  %v1867 = vsel %vm377, %v1815, 0
  %v1870 = vsel %vm377, %v1816, 0
  %v1873 = vsel %vm377, %v1817, 0
  %1875 = vmatprep.subr.mxu0 0.0
  %1876 = vmatpush1.msra.mxu0 %v1818
  %1877 = vmatprep.subr.mxu0 0.0
  %1878 = vmatpush1.msra.mxu0 %v1819
  %1879 = vmatprep.subr.mxu0 0.0
  %1880 = vmatpush1.msra.mxu0 %v1820
  %1881 = vmatprep.subr.mxu0 0.0
  %1882 = vmatpush1.msra.mxu0 %v1821
  %1883 = vmatprep.subr.mxu0 0.0
  %1884 = vmatpush1.msra.mxu0 0.0
  %1885 = vmatprep.subr.mxu0 0.0
  %1886 = vmatpush1.msra.mxu0 0.0
  %1887 = vmatprep.subr.mxu0 0.0
  %1888 = vmatpush1.msra.mxu0 0.0
  %1889 = vmatprep.subr.mxu0 0.0
  %1890 = vmatpush1.msra.mxu0 0.0
  %1891 = vmatprep.subr.mxu0 0.0
  %1892 = vmatpush1.msra.mxu0 0.0
  %1893 = vmatprep.subr.mxu0 0.0
  %1894 = vmatpush1.msra.mxu0 0.0
  %1895 = vmatprep.subr.mxu0 0.0
  %1896 = vmatpush1.msra.mxu0 0.0
  %1897 = vmatprep.subr.mxu0 0.0
  %1898 = vmatpush1.msra.mxu0 0.0
  %1899 = vmatprep.subr.mxu0 0.0
  %1900 = vmatpush1.msra.mxu0 0.0
  %1901 = vmatprep.subr.mxu0 0.0
  %1902 = vmatpush1.msra.mxu0 0.0
  %1903 = vmatprep.subr.mxu0 0.0
  %1904 = vmatpush1.msra.mxu0 0.0
  %1905 = vmatprep.subr.mxu0 0.0
  %1906 = vmatpush1.msra.mxu0 0.0
  %1907 = vmatprep.subr.mxu0 0.0
  %1908 = vmatpush1.msra.mxu0 0.0
  %1909 = vmatprep.subr.mxu0 0.0
  %1910 = vmatpush1.msra.mxu0 0.0
  %1911 = vmatprep.subr.mxu0 0.0
  %1912 = vmatpush1.msra.mxu0 0.0
  %1913 = vmatprep.subr.mxu0 0.0
  %1914 = vmatpush1.msra.mxu0 0.0
  %1915 = vmatprep.subr.mxu0 0.0
  %1916 = vmatpush1.msra.mxu0 0.0
  %1917 = vmatprep.subr.mxu0 0.0
  %1918 = vmatpush1.msra.mxu0 0.0
  %1919 = vmatprep.subr.mxu0 0.0
  %1920 = vmatpush1.msra.mxu0 0.0
  %1921 = vmatprep.subr.mxu0 0.0
  %1922 = vmatpush1.msra.mxu0 0.0
  %1923 = vmatprep.subr.mxu0 0.0
  %1924 = vmatpush1.msra.mxu0 0.0
  %1925 = vmatprep.subr.mxu0 0.0
  %1926 = vmatpush1.msra.mxu0 0.0
  %1927 = vmatprep.subr.mxu0 0.0
  %1928 = vmatpush1.msra.mxu0 0.0
  %1929 = vmatprep.subr.mxu0 0.0
  %1930 = vmatpush1.msra.mxu0 0.0
  %1931 = vmatprep.subr.mxu0 0.0
  %1932 = vmatpush1.msra.mxu0 0.0
  %1933 = vmatprep.subr.mxu0 0.0
  %1934 = vmatpush1.msra.mxu0 0.0
  %1935 = vmatprep.subr.mxu0 0.0
  %1936 = vmatpush1.msra.mxu0 0.0
  %1937 = vmatprep.subr.mxu0 0.0
  %1938 = vmatpush1.msra.mxu0 0.0
  %1939 = vmatprep.mubr.f32.mxu0 0.0
  %1940 = vmatmul.mubr.f32.gmra.mrb[0].mxu0 %v1828
  %v1941 = vpop.f32.mrb[0].mxu0
  %v1942 = vadd.f32 %v1826, %v1941
  %v1943 = vpop.f32.mrb[0].mxu0
  %1944 = vmatprep.mubr.f32.mxu0 0.0
  %1945 = vmatmul.mubr.f32.gmra.mrb[0].mxu0 %v1831
  %v1946 = vpop.f32.mrb[0].mxu0
  %v1947 = vadd.f32 %v1826, %v1946
  %v1948 = vpop.f32.mrb[0].mxu0
  %1949 = vmatprep.mubr.f32.mxu0 0.0
  %1950 = vmatmul.mubr.f32.gmra.mrb[0].mxu0 %v1834
  %v1951 = vpop.f32.mrb[0].mxu0
  %v1952 = vadd.f32 %v1826, %v1951
  %v1953 = vpop.f32.mrb[0].mxu0
  %1954 = vmatprep.mubr.f32.mxu0 0.0
  %1955 = vmatmul.mubr.f32.gmra.mrb[0].mxu0 %v1837
  %v1956 = vpop.f32.mrb[0].mxu0
  %v1957 = vadd.f32 %v1826, %v1956
  %v1958 = vpop.f32.mrb[0].mxu0
  %1959 = vmatprep.mubr.f32.mxu0 0.0
  %1960 = vmatmul.mubr.f32.gmra.mrb[0].mxu0 %v1840
  %v1961 = vpop.f32.mrb[0].mxu0
  %v1962 = vadd.f32 %v1826, %v1961
  %v1963 = vpop.f32.mrb[0].mxu0
  %1964 = vmatprep.mubr.f32.mxu0 0.0
  %1965 = vmatmul.mubr.f32.gmra.mrb[0].mxu0 %v1843
  %v1966 = vpop.f32.mrb[0].mxu0
  %v1967 = vadd.f32 %v1826, %v1966
  %v1968 = vpop.f32.mrb[0].mxu0
  %1969 = vmatprep.mubr.f32.mxu0 0.0
  %1970 = vmatmul.mubr.f32.gmra.mrb[0].mxu0 %v1846
  %v1971 = vpop.f32.mrb[0].mxu0
  %v1972 = vadd.f32 %v1826, %v1971
  %v1973 = vpop.f32.mrb[0].mxu0
  %1974 = vmatprep.mubr.f32.mxu0 0.0
  %1975 = vmatmul.mubr.f32.gmra.mrb[0].mxu0 %v1849
  %v1976 = vpop.f32.mrb[0].mxu0
  %v1977 = vadd.f32 %v1826, %v1976
  %v1978 = vpop.f32.mrb[0].mxu0
  %1979 = vmatprep.mubr.f32.mxu0 0.0
  %1980 = vmatmul.mubr.f32.gmra.mrb[0].mxu0 %v1852
  %v1981 = vpop.f32.mrb[0].mxu0
  %v1982 = vadd.f32 %v1826, %v1981
  %v1983 = vpop.f32.mrb[0].mxu0
  %1984 = vmatprep.mubr.f32.mxu0 0.0
  %1985 = vmatmul.mubr.f32.gmra.mrb[0].mxu0 %v1855
  %v1986 = vpop.f32.mrb[0].mxu0
  %v1987 = vadd.f32 %v1826, %v1986
  %v1988 = vpop.f32.mrb[0].mxu0
  %1989 = vmatprep.mubr.f32.mxu0 0.0
  %1990 = vmatmul.mubr.f32.gmra.mrb[0].mxu0 %v1858
  %v1991 = vpop.f32.mrb[0].mxu0
  %v1992 = vadd.f32 %v1826, %v1991
  %v1993 = vpop.f32.mrb[0].mxu0
  %1994 = vmatprep.mubr.f32.mxu0 0.0
  %1995 = vmatmul.mubr.f32.gmra.mrb[0].mxu0 %v1861
  %v1996 = vpop.f32.mrb[0].mxu0
  %v1997 = vadd.f32 %v1826, %v1996
  %v1998 = vpop.f32.mrb[0].mxu0
  %1999 = vmatprep.mubr.f32.mxu0 0.0
  %2000 = vmatmul.mubr.f32.gmra.mrb[0].mxu0 %v1864
  %v2001 = vpop.f32.mrb[0].mxu0
  %v2002 = vadd.f32 %v1826, %v2001
  %v2003 = vpop.f32.mrb[0].mxu0
  %2004 = vmatprep.mubr.f32.mxu0 0.0
  %2005 = vmatmul.mubr.f32.gmra.mrb[0].mxu0 %v1867
  %v2006 = vpop.f32.mrb[0].mxu0
  %v2007 = vadd.f32 %v1826, %v2006
  %v2008 = vpop.f32.mrb[0].mxu0
  %2009 = vmatprep.mubr.f32.mxu0 0.0
  %2010 = vmatmul.mubr.f32.gmra.mrb[0].mxu0 %v1870
  %v2011 = vpop.f32.mrb[0].mxu0
  %v2012 = vadd.f32 %v1826, %v2011
  %v2013 = vpop.f32.mrb[0].mxu0
  %2014 = vmatprep.mubr.f32.mxu0 0.0
  %2015 = vmatmul.mubr.f32.gmra.mrb[0].mxu0 %v1873
  %v2016 = vpop.f32.mrb[0].mxu0
  %v2017 = vadd.f32 %v1826, %v2016
  %v2018 = vpop.f32.mrb[0].mxu0
  %2019 = vdwg.mxu0
  %2036 = vrot.lane.b32.xlu0 %v1942, 18
  %v2037 = vpop.permute.xlu0 %2036
  %2038 = vrot.lane.b32.xlu0 %v1947, 18
  %v2039 = vpop.permute.xlu0 %2038
  %2040 = vrot.lane.b32.xlu0 %v1952, 18
  %v2041 = vpop.permute.xlu0 %2040
  %2042 = vrot.lane.b32.xlu0 %v1957, 18
  %v2043 = vpop.permute.xlu0 %2042
  %2044 = vrot.lane.b32.xlu0 %v1962, 18
  %v2045 = vpop.permute.xlu0 %2044
  %2046 = vrot.lane.b32.xlu0 %v1967, 18
  %v2047 = vpop.permute.xlu0 %2046
  %2048 = vrot.lane.b32.xlu0 %v1972, 18
  %v2049 = vpop.permute.xlu0 %2048
  %2050 = vrot.lane.b32.xlu0 %v1977, 18
  %v2051 = vpop.permute.xlu0 %2050
  %2052 = vrot.lane.b32.xlu0 %v1982, 18
  %v2053 = vpop.permute.xlu0 %2052
  %2054 = vrot.lane.b32.xlu0 %v1987, 18
  %v2055 = vpop.permute.xlu0 %2054
  %2056 = vrot.lane.b32.xlu0 %v1992, 18
  %v2057 = vpop.permute.xlu0 %2056
  %2058 = vrot.lane.b32.xlu0 %v1997, 18
  %v2059 = vpop.permute.xlu0 %2058
  %2060 = vrot.lane.b32.xlu0 %v2002, 18
  %v2061 = vpop.permute.xlu0 %2060
  %2062 = vrot.lane.b32.xlu0 %v2007, 18
  %v2063 = vpop.permute.xlu0 %2062
  %2064 = vrot.lane.b32.xlu0 %v2012, 18
  %v2065 = vpop.permute.xlu0 %2064
  %2066 = vrot.lane.b32.xlu0 %v2017, 18
  %v2067 = vpop.permute.xlu0 %2066
  %2100 = vrot.lane.b32.xlu0 %v711, 34
  %v2101 = vpop.permute.xlu0 %2100
  %2102 = vrot.lane.b32.xlu0 %v716, 34
  %v2103 = vpop.permute.xlu0 %2102
  %2104 = vrot.lane.b32.xlu0 %v721, 34
  %v2105 = vpop.permute.xlu0 %2104
  %2106 = vrot.lane.b32.xlu0 %v726, 34
  %v2107 = vpop.permute.xlu0 %2106
  %2108 = vrot.lane.b32.xlu0 %v731, 34
  %v2109 = vpop.permute.xlu0 %2108
  %2110 = vrot.lane.b32.xlu0 %v736, 34
  %v2111 = vpop.permute.xlu0 %2110
  %2112 = vrot.lane.b32.xlu0 %v741, 34
  %v2113 = vpop.permute.xlu0 %2112
  %2114 = vrot.lane.b32.xlu0 %v746, 34
  %v2115 = vpop.permute.xlu0 %2114
  %2116 = vrot.lane.b32.xlu0 %v751, 34
  %v2117 = vpop.permute.xlu0 %2116
  %2118 = vrot.lane.b32.xlu0 %v756, 34
  %v2119 = vpop.permute.xlu0 %2118
  %2120 = vrot.lane.b32.xlu0 %v761, 34
  %v2121 = vpop.permute.xlu0 %2120
  %2122 = vrot.lane.b32.xlu0 %v766, 34
  %v2123 = vpop.permute.xlu0 %2122
  %2124 = vrot.lane.b32.xlu0 %v771, 34
  %v2125 = vpop.permute.xlu0 %2124
  %2126 = vrot.lane.b32.xlu0 %v776, 34
  %v2127 = vpop.permute.xlu0 %2126
  %2128 = vrot.lane.b32.xlu0 %v781, 34
  %v2129 = vpop.permute.xlu0 %2128
  %2130 = vrot.lane.b32.xlu0 %v786, 34
  %v2131 = vpop.permute.xlu0 %2130
  %2164 = vrot.lane.b32.xlu0 %v806, 34
  %v2165 = vpop.permute.xlu0 %2164
  %2166 = vrot.lane.b32.xlu0 %v808, 34
  %v2167 = vpop.permute.xlu0 %2166
  %2168 = vrot.lane.b32.xlu0 %v810, 34
  %v2169 = vpop.permute.xlu0 %2168
  %2170 = vrot.lane.b32.xlu0 %v812, 34
  %v2171 = vpop.permute.xlu0 %2170
  %2172 = vrot.lane.b32.xlu0 %v814, 34
  %v2173 = vpop.permute.xlu0 %2172
  %2174 = vrot.lane.b32.xlu0 %v816, 34
  %v2175 = vpop.permute.xlu0 %2174
  %2176 = vrot.lane.b32.xlu0 %v818, 34
  %v2177 = vpop.permute.xlu0 %2176
  %2178 = vrot.lane.b32.xlu0 %v820, 34
  %v2179 = vpop.permute.xlu0 %2178
  %2180 = vrot.lane.b32.xlu0 %v822, 34
  %v2181 = vpop.permute.xlu0 %2180
  %2182 = vrot.lane.b32.xlu0 %v824, 34
  %v2183 = vpop.permute.xlu0 %2182
  %2184 = vrot.lane.b32.xlu0 %v826, 34
  %v2185 = vpop.permute.xlu0 %2184
  %2186 = vrot.lane.b32.xlu0 %v828, 34
  %v2187 = vpop.permute.xlu0 %2186
  %2188 = vrot.lane.b32.xlu0 %v830, 34
  %v2189 = vpop.permute.xlu0 %2188
  %2190 = vrot.lane.b32.xlu0 %v832, 34
  %v2191 = vpop.permute.xlu0 %2190
  %2192 = vrot.lane.b32.xlu0 %v834, 34
  %v2193 = vpop.permute.xlu0 %2192
  %2194 = vrot.lane.b32.xlu0 %v836, 34
  %v2195 = vpop.permute.xlu0 %2194
  %vm2212 = vcmask 146432
  %v2213 = vsel %vm2212, %v1490, %v2037
  %v2214 = vsel %vm2212, %v1495, %v2039
  %v2215 = vsel %vm2212, %v1500, %v2041
  %v2216 = vsel %vm2212, %v1505, %v2043
  %v2217 = vsel %vm2212, %v1510, %v2045
  %v2218 = vsel %vm2212, %v1515, %v2047
  %v2219 = vsel %vm2212, %v1520, %v2049
  %v2220 = vsel %vm2212, %v1525, %v2051
  %v2221 = vsel %vm2212, %v1530, %v2053
  %v2222 = vsel %vm2212, %v1535, %v2055
  %v2223 = vsel %vm2212, %v1540, %v2057
  %v2224 = vsel %vm2212, %v1545, %v2059
  %v2225 = vsel %vm2212, %v1550, %v2061
  %v2226 = vsel %vm2212, %v1555, %v2063
  %v2227 = vsel %vm2212, %v1560, %v2065
  %v2228 = vsel %vm2212, %v1565, %v2067
  %vm2229 = vcmask 277504
  %v2230 = vsel %vm2229, %v2213, %v2101
  %v2231 = vsel %vm2229, %v2214, %v2103
  %v2232 = vsel %vm2229, %v2215, %v2105
  %v2233 = vsel %vm2229, %v2216, %v2107
  %v2234 = vsel %vm2229, %v2217, %v2109
  %v2235 = vsel %vm2229, %v2218, %v2111
  %v2236 = vsel %vm2229, %v2219, %v2113
  %v2237 = vsel %vm2229, %v2220, %v2115
  %v2238 = vsel %vm2229, %v2221, %v2117
  %v2239 = vsel %vm2229, %v2222, %v2119
  %v2240 = vsel %vm2229, %v2223, %v2121
  %v2241 = vsel %vm2229, %v2224, %v2123
  %v2242 = vsel %vm2229, %v2225, %v2125
  %v2243 = vsel %vm2229, %v2226, %v2127
  %v2244 = vsel %vm2229, %v2227, %v2129
  %v2245 = vsel %vm2229, %v2228, %v2131
  %vm2246 = vcmask 343040
  %v2247 = vsel %vm2246, %v2230, %v2165
  %v2248 = vsel %vm2246, %v2231, %v2167
  %v2249 = vsel %vm2246, %v2232, %v2169
  %v2250 = vsel %vm2246, %v2233, %v2171
  %v2251 = vsel %vm2246, %v2234, %v2173
  %v2252 = vsel %vm2246, %v2235, %v2175
  %v2253 = vsel %vm2246, %v2236, %v2177
  %v2254 = vsel %vm2246, %v2237, %v2179
  %v2255 = vsel %vm2246, %v2238, %v2181
  %v2256 = vsel %vm2246, %v2239, %v2183
  %v2257 = vsel %vm2246, %v2240, %v2185
  %v2258 = vsel %vm2246, %v2241, %v2187
  %v2259 = vsel %vm2246, %v2242, %v2189
  %v2260 = vsel %vm2246, %v2243, %v2191
  %v2261 = vsel %vm2246, %v2244, %v2193
  %v2262 = vsel %vm2246, %v2245, %v2195
  %vm2263 = vcmask 408576
  %v2264 = vsel %vm2263, %v2247, 0.0
  %v2265 = vsel %vm2263, %v2248, 0.0
  %v2266 = vsel %vm2263, %v2249, 0.0
  %v2267 = vsel %vm2263, %v2250, 0.0
  %v2268 = vsel %vm2263, %v2251, 0.0
  %v2269 = vsel %vm2263, %v2252, 0.0
  %v2270 = vsel %vm2263, %v2253, 0.0
  %v2271 = vsel %vm2263, %v2254, 0.0
  %v2272 = vsel %vm2263, %v2255, 0.0
  %v2273 = vsel %vm2263, %v2256, 0.0
  %v2274 = vsel %vm2263, %v2257, 0.0
  %v2275 = vsel %vm2263, %v2258, 0.0
  %v2276 = vsel %vm2263, %v2259, 0.0
  %v2277 = vsel %vm2263, %v2260, 0.0
  %v2278 = vsel %vm2263, %v2261, 0.0
  %v2279 = vsel %vm2263, %v2262, 0.0
  %2280 = vst [vmem:[%s5] sm:$0xff] %v2264
  %2281 = vst [vmem:[%s5 + $0x8] sm:$0xff] %v2265
  %2282 = vst [vmem:[%s5 + $0x10] sm:$0xff] %v2266
  %2283 = vst [vmem:[%s5 + $0x18] sm:$0xff] %v2267
  %2284 = vst [vmem:[%s5 + $0x20] sm:$0xff] %v2268
  %2285 = vst [vmem:[%s5 + $0x28] sm:$0xff] %v2269
  %2286 = vst [vmem:[%s5 + $0x30] sm:$0xff] %v2270
  %2287 = vst [vmem:[%s5 + $0x38] sm:$0xff] %v2271
  %2288 = vst [vmem:[%s5 + $0x40] sm:$0xff] %v2272
  %2289 = vst [vmem:[%s5 + $0x48] sm:$0xff] %v2273
  %2290 = vst [vmem:[%s5 + $0x50] sm:$0xff] %v2274
  %2291 = vst [vmem:[%s5 + $0x58] sm:$0xff] %v2275
  %2292 = vst [vmem:[%s5 + $0x60] sm:$0xff] %v2276
  %2293 = vst [vmem:[%s5 + $0x68] sm:$0xff] %v2277
  %2294 = vst [vmem:[%s5 + $0x70] sm:$0xff] %v2278
  %2295 = vst [vmem:[%s5 + $0x78] sm:$0xff] %v2279
  // Predicated region
  $region22: #{simulator_forward.1} parent=0 // pred_check
    _
  $region23: #{simulator_forward.1} parent=0 // pred_check_branch
    %2297 = sbr.rel (0) target = $region25
  $region24: #{simulator_forward.1} parent=0 // pred_region
    _
  $region25: #{simulator_forward.1} parent=0 // pred_fallthru
    _
  // Predicated region
  $region26: #{simulator_forward.1} parent=0 // pred_check
    _
  $region27: #{simulator_forward.1} parent=0 // pred_check_branch
    %2299 = sbr.rel (0) target = $region29
  $region28: #{simulator_forward.1} parent=0 // pred_region
    _
  $region29: #{simulator_forward.1} parent=0 // pred_fallthru
    _

</llo_original>
